<compile_context>
chip_gen: v7x
topology: tpu7x:2x2x1
jax: 0.10.0
libtpu: 0.0.40
codegen_flags: <defaults>
</compile_context>

<pallas_src>
import functools

import jax
import jax.numpy as jnp
from jax.experimental import pallas as pl
from jax.experimental.pallas import tpu as pltpu


def _round_up(x, m):
    return (x + m - 1) // m * m


def _lstm_kernel(x_ref, wih_ref, whh_ref, b_ref, wfc_ref, bfc_ref,
                 out_ref, hn_ref, cn_ref, gx_ref, *, seq_len):
    """Whole-sequence LSTM + classifier head, single invocation (grid=()).

    x_ref   : (T*Bp, Dp)     bf16  time-major flattened inputs (row t*Bp + b = x[b, t])
    wih_ref : (Dp, 4*Hp)     bf16  W_ih^T (gate-block padded)
    whh_ref : (Hp, 4*Hp)     bf16  W_hh^T (gate-block padded)
    b_ref   : (1, 4*Hp)      f32   b_ih + b_hh (gate-block padded, zeros on pad lanes)
    wfc_ref : (Hp, Cp)       bf16  W_fc^T
    bfc_ref : (1, Cp)        f32   b_fc
    out_ref : (Bp, Cp)       f32   sigmoid(fc(h_T))
    hn_ref  : (Bp, Hp)       f32   h_T
    cn_ref  : (Bp, Hp)       f32   c_T
    gx_ref  : (T, Bp, 4*Hp)  bf16  scratch: hoisted input projection, time-major
    """
    T = seq_len
    _, Bp, _ = gx_ref.shape
    Hp = hn_ref.shape[1]

    # (1) Hoisted input projection for ALL timesteps at once: one big MXU matmul
    #     (bf16 operands, f32 accumulation).  Bias is folded here (off the serial
    #     recurrence path).  Stored bf16 + time-major 3-D so each per-step read is a
    #     full aligned tile.  Stores below use static, tile-aligned slices (Bp % 16 == 0).
    gx = (jnp.dot(x_ref[...], wih_ref[...], preferred_element_type=jnp.float32)
          + b_ref[...]).astype(jnp.bfloat16)
    for t in range(T):                      # static trace-time loop, T stores
        gx_ref[t] = gx[t * Bp:(t + 1) * Bp, :]
    # TODO(synk): for long sequences where (T, Bp, 4Hp) no longer fits VMEM (binds
    # first on v7x's 64 MiB), chunk this projection over T with pltpu.emit_pipeline
    # so only a bounded gx window is resident.

    # (2) Sequential recurrence: only the recurrent matmul + gate math per step.
    whh = whh_ref[...]   # hoisted: W_hh loaded once, not re-read (128 KiB) every step
    # TODO(synk): when Hp x 4Hp fits a single MXU staging tile, stage W_hh once with
    # pltpu.matmul_push_rhs and drive the loop with matmul_acc_lhs/matmul_pop.

    def step(t, carry):
        h, c = carry
        gates = gx_ref[t].astype(jnp.float32) + jnp.dot(
            h.astype(jnp.bfloat16), whh, preferred_element_type=jnp.float32)
        # Hp is a multiple of 128 -> every gate slice is a lane-aligned vreg view.
        i_g = jax.nn.sigmoid(gates[:, 0 * Hp:1 * Hp])
        f_g = jax.nn.sigmoid(gates[:, 1 * Hp:2 * Hp])
        g_g = jnp.tanh(gates[:, 2 * Hp:3 * Hp])
        o_g = jax.nn.sigmoid(gates[:, 3 * Hp:4 * Hp])
        c_new = f_g * c + i_g * g_g
        h_new = o_g * jnp.tanh(c_new)
        return h_new, c_new

    h0 = jnp.zeros((Bp, Hp), jnp.float32)
    c0 = jnp.zeros((Bp, Hp), jnp.float32)
    # Bounded partial unroll: keeps the loop visible to the LLO scheduler without
    # blowing the instruction footprint / vreg pressure of a full unroll.
    h_last, c_last = jax.lax.fori_loop(0, T, step, (h0, c0), unroll=min(T, 8))

    # (3) Classifier head (fires once).  Cp >= 128 => lane-dense, unmasked stores.
    logits = jnp.dot(h_last.astype(jnp.bfloat16), wfc_ref[...],
                     preferred_element_type=jnp.float32) + bfc_ref[...]
    out_ref[...] = jax.nn.sigmoid(logits)
    hn_ref[...] = h_last
    cn_ref[...] = c_last


def classifier_lstm_forward(inputs, params):
    """inputs: (B, T, D) float32. Returns (out (B, C), (h_n (1, B, H), c_n (1, B, H)))."""
    B, T, D = inputs.shape
    w_ih, w_hh = params["w_ih"], params["w_hh"]
    b_ih, b_hh = params["b_ih"], params["b_hh"]
    w_fc, b_fc = params["w_fc"], params["b_fc"]
    H = w_hh.shape[1]
    C = w_fc.shape[0]

    f32 = jnp.float32
    bf16 = jnp.bfloat16

    # TPU-friendly padding (exact for hidden/input/class dims, see kernel header).
    Bp = max(16, _round_up(B, 16))     # native bf16 sublane tile (16 rows)
    Hp = _round_up(H, 128)             # lane multiple
    Dp = _round_up(D, 128)             # lane multiple (matmul K dim, zero-padded;
                                       # kept padded so the projection never reads
                                       # garbage K lanes — see review note)
    Cp = _round_up(C, 128)             # lane multiple

    # Gate-block padding: gate k occupies rows [k*Hp, k*Hp + H) (zeros elsewhere).
    def pad_gate_blocks(w, out_cols):
        out = jnp.zeros((4 * Hp, out_cols), f32)
        for k in range(4):
            out = out.at[k * Hp:k * Hp + H, :w.shape[1]].set(
                w[k * H:(k + 1) * H, :].astype(f32))
        return out

    w_ih_p = pad_gate_blocks(w_ih, Dp)          # (4Hp, Dp)
    w_hh_p = pad_gate_blocks(w_hh, Hp)          # (4Hp, Hp)

    b_comb = (b_ih + b_hh).astype(f32)
    b_p = jnp.zeros((4 * Hp,), f32)
    for k in range(4):
        b_p = b_p.at[k * Hp:k * Hp + H].set(b_comb[k * H:(k + 1) * H])

    w_fc_p = jnp.zeros((Cp, Hp), f32).at[:C, :H].set(w_fc.astype(f32))
    b_fc_p = jnp.zeros((Cp,), f32).at[:C].set(b_fc.astype(f32))

    # Time-major, batch/feature padded, flattened inputs: row t*Bp + b = x[b, t, :].
    # Built directly in bf16 (no f32 padded intermediate / extra HBM pass).
    x_tm = jnp.transpose(inputs.astype(bf16), (1, 0, 2))            # (T, B, D)
    x_p = jnp.zeros((T, Bp, Dp), bf16).at[:, :B, :D].set(x_tm)      # (T, Bp, Dp)
    x_flat = x_p.reshape(T * Bp, Dp)

    wih_t = jnp.transpose(w_ih_p).astype(bf16)   # (Dp, 4Hp)
    whh_t = jnp.transpose(w_hh_p).astype(bf16)   # (Hp, 4Hp)
    wfc_t = jnp.transpose(w_fc_p).astype(bf16)   # (Hp, Cp)
    bias = b_p.reshape(1, 4 * Hp)                # (1, 4Hp) f32
    bfc = b_fc_p.reshape(1, Cp)                  # (1, Cp)  f32

    # --- VMEM budget: everything is resident once (grid=() => no double-buffering).
    io_bytes = (
        T * Bp * Dp * 2            # x_flat (bf16)
        + Dp * 4 * Hp * 2          # W_ih^T
        + Hp * 4 * Hp * 2          # W_hh^T
        + 4 * Hp * 4               # bias
        + Hp * Cp * 2              # W_fc^T
        + Cp * 4                   # b_fc
        + Bp * Cp * 4              # out
        + 2 * Bp * Hp * 4          # h_n, c_n
    )
    gx_bytes = T * Bp * 4 * Hp * 2                 # bf16 gx scratch
    resident_bytes = io_bytes + gx_bytes
    try:
        phys_vmem = int(pltpu.get_tpu_info().vmem_capacity_bytes)
    except Exception:  # pragma: no cover - conservative default (v7x per-TC VMEM)
        phys_vmem = 64 * 1024 * 1024
    vmem_limit = min(2 * resident_bytes + (8 << 20), phys_vmem - (4 << 20))
    vmem_limit = int(max(vmem_limit, 16 << 20))

    flops = (2 * T * Bp * Dp * 4 * Hp      # hoisted input projection
             + 2 * T * Bp * Hp * 4 * Hp    # recurrence
             + 2 * Bp * Hp * Cp)           # FC head
    transcendentals = T * Bp * 5 * Hp + Bp * Cp   # 3 sigmoid + 2 tanh per step + head

    vmem_spec = pl.BlockSpec(memory_space=pltpu.MemorySpace.VMEM)
    kernel = functools.partial(_lstm_kernel, seq_len=T)

    # TODO(synk): for large production batches on v7x, add a leading "parallel"
    # batch-tile grid axis (tiles >= 16 rows) so the second TensorCore runs an
    # independent batch shard; no-op on v5e/v6e (1 TC).
    out_p, hn_p, cn_p = pl.pallas_call(
        kernel,
        out_shape=(
            jax.ShapeDtypeStruct((Bp, Cp), jnp.float32),
            jax.ShapeDtypeStruct((Bp, Hp), jnp.float32),
            jax.ShapeDtypeStruct((Bp, Hp), jnp.float32),
        ),
        in_specs=[vmem_spec] * 6,
        out_specs=(vmem_spec, vmem_spec, vmem_spec),
        scratch_shapes=[pltpu.VMEM((T, Bp, 4 * Hp), jnp.bfloat16)],
        compiler_params=pltpu.CompilerParams(vmem_limit_bytes=vmem_limit),
        cost_estimate=pl.CostEstimate(
            flops=int(flops),
            transcendentals=int(transcendentals),
            bytes_accessed=int(io_bytes)),
    )(x_flat, wih_t, whh_t, bias, wfc_t, bfc)

    out = out_p[:B, :C]
    h_n = hn_p[:B, :H][None]
    c_n = cn_p[:B, :H][None]
    return out, (h_n, c_n)


def _reference_forward(inputs, params):
    """Pure-JAX f32 reference mirroring torch.nn.LSTM + Linear + Sigmoid."""
    w_ih, w_hh, b_ih, b_hh, w_fc, b_fc = (
        params["w_ih"], params["w_hh"], params["b_ih"], params["b_hh"],
        params["w_fc"], params["b_fc"])
    B, T, D = inputs.shape
    H = w_hh.shape[1]
    h = jnp.zeros((B, H), jnp.float32)
    c = jnp.zeros((B, H), jnp.float32)
    for t in range(T):
        x_t = inputs[:, t, :]
        gates = x_t @ w_ih.T + h @ w_hh.T + b_ih + b_hh
        i = jax.nn.sigmoid(gates[:, 0 * H:1 * H])
        f = jax.nn.sigmoid(gates[:, 1 * H:2 * H])
        g = jnp.tanh(gates[:, 2 * H:3 * H])
        o = jax.nn.sigmoid(gates[:, 3 * H:4 * H])
        c = f * c + i * g
        h = o * jnp.tanh(c)
    out = jax.nn.sigmoid(h @ w_fc.T + b_fc)
    return out, (h[None], c[None])


if __name__ == "__main__":
    # Small shapes consistent with the module: nl=1 layer, batch_first LSTM.
    B, T, D, H, C = 2, 8, 16, 32, 4   # batch, seq, INPUT_DIM, hd, NUM_CLASSES

    key = jax.random.PRNGKey(0)
    ks = jax.random.split(key, 7)
    scale = 1.0 / jnp.sqrt(H)
    params = {
        "w_ih": jax.random.uniform(ks[0], (4 * H, D), jnp.float32, -scale, scale),
        "w_hh": jax.random.uniform(ks[1], (4 * H, H), jnp.float32, -scale, scale),
        "b_ih": jax.random.uniform(ks[2], (4 * H,), jnp.float32, -scale, scale),
        "b_hh": jax.random.uniform(ks[3], (4 * H,), jnp.float32, -scale, scale),
        "w_fc": jax.random.uniform(ks[4], (C, H), jnp.float32, -scale, scale),
        "b_fc": jax.random.uniform(ks[5], (C,), jnp.float32, -scale, scale),
    }
    inputs = jax.random.normal(ks[6], (B, T, D), jnp.float32)
    x_lengths = jnp.full((B,), T, jnp.int32)   # unused by forward(), kept for API parity
    hidden0 = (jnp.zeros((1, B, H)), jnp.zeros((1, B, H)))  # unused by forward()

    out, (h_n, c_n) = classifier_lstm_forward(inputs, params)
    jax.block_until_ready(out)
    jax.block_until_ready(h_n)
    jax.block_until_ready(c_n)

    ref_out, (ref_h, ref_c) = _reference_forward(inputs, params)
    assert out.shape == (B, C) and h_n.shape == (1, B, H) and c_n.shape == (1, B, H)
    # bf16 matmul operands + bf16 gx storage (f32 accumulation/state) => looser
    # tolerance than pure f32.  Re-validate for long T / large H before relying on it.
    assert jnp.allclose(out, ref_out, atol=3e-2, rtol=0)
    assert jnp.allclose(h_n, ref_h, atol=3e-2, rtol=0)
    assert jnp.allclose(c_n, ref_c, atol=3e-2, rtol=0)

    print("KERNEL_OK")
</pallas_src>

<mosaic_0001>
module attributes {stable_mosaic.version = 11 : i64} {
  func.func @_lstm_kernel(%arg0: memref<128x128xbf16, #tpu.memory_space<vmem>>, %arg1: memref<128x512xbf16, #tpu.memory_space<vmem>>, %arg2: memref<128x512xbf16, #tpu.memory_space<vmem>>, %arg3: memref<1x512xf32, #tpu.memory_space<vmem>>, %arg4: memref<128x128xbf16, #tpu.memory_space<vmem>>, %arg5: memref<1x128xf32, #tpu.memory_space<vmem>>, %arg6: memref<16x128xf32, #tpu.memory_space<vmem>>, %arg7: memref<16x128xf32, #tpu.memory_space<vmem>>, %arg8: memref<16x128xf32, #tpu.memory_space<vmem>>, %arg9: memref<8x16x512xbf16, #tpu.memory_space<vmem>>) attributes {dimension_semantics = [], scalar_prefetch = 0 : i64, scratch_operands = 1 : i64, tpu.core_type = #tpu.core_type<tc>} {
    %c0 = arith.constant 0 : index
    %c0_0 = arith.constant 0 : index
    %0 = vector.load %arg0[%c0, %c0_0] : memref<128x128xbf16, #tpu.memory_space<vmem>>, vector<128x128xbf16>
    %c0_1 = arith.constant 0 : index
    %c0_2 = arith.constant 0 : index
    %1 = vector.load %arg1[%c0_1, %c0_2] : memref<128x512xbf16, #tpu.memory_space<vmem>>, vector<128x512xbf16>
    %cst = arith.constant dense<0.000000e+00> : vector<128x512xf32>
    %2 = tpu.matmul %0, %1, %cst {dimension_numbers = #tpu.dot_dimension_numbers<[1], [0], [0], [1], [0, 0, 1, 1], [], []>} : vector<128x128xbf16>, vector<128x512xbf16>, vector<128x512xf32> -> vector<128x512xf32>
    %c0_3 = arith.constant 0 : index
    %c0_4 = arith.constant 0 : index
    %3 = vector.load %arg3[%c0_3, %c0_4] : memref<1x512xf32, #tpu.memory_space<vmem>>, vector<1x512xf32>
    %4 = vector.broadcast %3 : vector<1x512xf32> to vector<128x512xf32>
    %5 = arith.addf %2, %4 : vector<128x512xf32>
    %6 = arith.truncf %5 : vector<128x512xf32> to vector<128x512xbf16>
    %7 = vector.extract_strided_slice %6 {offsets = [0, 0], sizes = [16, 512], strides = [1, 1]} : vector<128x512xbf16> to vector<16x512xbf16>
    %c0_5 = arith.constant 0 : index
    %c0_6 = arith.constant 0 : index
    %c0_7 = arith.constant 0 : index
    %8 = vector.load %arg9[%c0_5, %c0_6, %c0_7] : memref<8x16x512xbf16, #tpu.memory_space<vmem>>, vector<1x16x512xbf16>
    %9 = vector.shape_cast %8 : vector<1x16x512xbf16> to vector<16x512xbf16>
    %10 = vector.shape_cast %7 : vector<16x512xbf16> to vector<1x16x512xbf16>
    tpu.vector_store %arg9[%c0_5, %c0_6, %c0_7], %10 {strides = array<i32>} : memref<8x16x512xbf16, #tpu.memory_space<vmem>>, vector<1x16x512xbf16>,
    %11 = vector.extract_strided_slice %6 {offsets = [16, 0], sizes = [16, 512], strides = [1, 1]} : vector<128x512xbf16> to vector<16x512xbf16>
    %c1 = arith.constant 1 : index
    %c0_8 = arith.constant 0 : index
    %c0_9 = arith.constant 0 : index
    %12 = vector.load %arg9[%c1, %c0_8, %c0_9] : memref<8x16x512xbf16, #tpu.memory_space<vmem>>, vector<1x16x512xbf16>
    %13 = vector.shape_cast %12 : vector<1x16x512xbf16> to vector<16x512xbf16>
    %14 = vector.shape_cast %11 : vector<16x512xbf16> to vector<1x16x512xbf16>
    tpu.vector_store %arg9[%c1, %c0_8, %c0_9], %14 {strides = array<i32>} : memref<8x16x512xbf16, #tpu.memory_space<vmem>>, vector<1x16x512xbf16>,
    %15 = vector.extract_strided_slice %6 {offsets = [32, 0], sizes = [16, 512], strides = [1, 1]} : vector<128x512xbf16> to vector<16x512xbf16>
    %c2 = arith.constant 2 : index
    %c0_10 = arith.constant 0 : index
    %c0_11 = arith.constant 0 : index
    %16 = vector.load %arg9[%c2, %c0_10, %c0_11] : memref<8x16x512xbf16, #tpu.memory_space<vmem>>, vector<1x16x512xbf16>
    %17 = vector.shape_cast %16 : vector<1x16x512xbf16> to vector<16x512xbf16>
    %18 = vector.shape_cast %15 : vector<16x512xbf16> to vector<1x16x512xbf16>
    tpu.vector_store %arg9[%c2, %c0_10, %c0_11], %18 {strides = array<i32>} : memref<8x16x512xbf16, #tpu.memory_space<vmem>>, vector<1x16x512xbf16>,
    %19 = vector.extract_strided_slice %6 {offsets = [48, 0], sizes = [16, 512], strides = [1, 1]} : vector<128x512xbf16> to vector<16x512xbf16>
    %c3 = arith.constant 3 : index
    %c0_12 = arith.constant 0 : index
    %c0_13 = arith.constant 0 : index
    %20 = vector.load %arg9[%c3, %c0_12, %c0_13] : memref<8x16x512xbf16, #tpu.memory_space<vmem>>, vector<1x16x512xbf16>
    %21 = vector.shape_cast %20 : vector<1x16x512xbf16> to vector<16x512xbf16>
    %22 = vector.shape_cast %19 : vector<16x512xbf16> to vector<1x16x512xbf16>
    tpu.vector_store %arg9[%c3, %c0_12, %c0_13], %22 {strides = array<i32>} : memref<8x16x512xbf16, #tpu.memory_space<vmem>>, vector<1x16x512xbf16>,
    %23 = vector.extract_strided_slice %6 {offsets = [64, 0], sizes = [16, 512], strides = [1, 1]} : vector<128x512xbf16> to vector<16x512xbf16>
    %c4 = arith.constant 4 : index
    %c0_14 = arith.constant 0 : index
    %c0_15 = arith.constant 0 : index
    %24 = vector.load %arg9[%c4, %c0_14, %c0_15] : memref<8x16x512xbf16, #tpu.memory_space<vmem>>, vector<1x16x512xbf16>
    %25 = vector.shape_cast %24 : vector<1x16x512xbf16> to vector<16x512xbf16>
    %26 = vector.shape_cast %23 : vector<16x512xbf16> to vector<1x16x512xbf16>
    tpu.vector_store %arg9[%c4, %c0_14, %c0_15], %26 {strides = array<i32>} : memref<8x16x512xbf16, #tpu.memory_space<vmem>>, vector<1x16x512xbf16>,
    %27 = vector.extract_strided_slice %6 {offsets = [80, 0], sizes = [16, 512], strides = [1, 1]} : vector<128x512xbf16> to vector<16x512xbf16>
    %c5 = arith.constant 5 : index
    %c0_16 = arith.constant 0 : index
    %c0_17 = arith.constant 0 : index
    %28 = vector.load %arg9[%c5, %c0_16, %c0_17] : memref<8x16x512xbf16, #tpu.memory_space<vmem>>, vector<1x16x512xbf16>
    %29 = vector.shape_cast %28 : vector<1x16x512xbf16> to vector<16x512xbf16>
    %30 = vector.shape_cast %27 : vector<16x512xbf16> to vector<1x16x512xbf16>
    tpu.vector_store %arg9[%c5, %c0_16, %c0_17], %30 {strides = array<i32>} : memref<8x16x512xbf16, #tpu.memory_space<vmem>>, vector<1x16x512xbf16>,
    %31 = vector.extract_strided_slice %6 {offsets = [96, 0], sizes = [16, 512], strides = [1, 1]} : vector<128x512xbf16> to vector<16x512xbf16>
    %c6 = arith.constant 6 : index
    %c0_18 = arith.constant 0 : index
    %c0_19 = arith.constant 0 : index
    %32 = vector.load %arg9[%c6, %c0_18, %c0_19] : memref<8x16x512xbf16, #tpu.memory_space<vmem>>, vector<1x16x512xbf16>
    %33 = vector.shape_cast %32 : vector<1x16x512xbf16> to vector<16x512xbf16>
    %34 = vector.shape_cast %31 : vector<16x512xbf16> to vector<1x16x512xbf16>
    tpu.vector_store %arg9[%c6, %c0_18, %c0_19], %34 {strides = array<i32>} : memref<8x16x512xbf16, #tpu.memory_space<vmem>>, vector<1x16x512xbf16>,
    %35 = vector.extract_strided_slice %6 {offsets = [112, 0], sizes = [16, 512], strides = [1, 1]} : vector<128x512xbf16> to vector<16x512xbf16>
    %c7 = arith.constant 7 : index
    %c0_20 = arith.constant 0 : index
    %c0_21 = arith.constant 0 : index
    %36 = vector.load %arg9[%c7, %c0_20, %c0_21] : memref<8x16x512xbf16, #tpu.memory_space<vmem>>, vector<1x16x512xbf16>
    %37 = vector.shape_cast %36 : vector<1x16x512xbf16> to vector<16x512xbf16>
    %38 = vector.shape_cast %35 : vector<16x512xbf16> to vector<1x16x512xbf16>
    tpu.vector_store %arg9[%c7, %c0_20, %c0_21], %38 {strides = array<i32>} : memref<8x16x512xbf16, #tpu.memory_space<vmem>>, vector<1x16x512xbf16>,
    %c0_22 = arith.constant 0 : index
    %c0_23 = arith.constant 0 : index
    %39 = vector.load %arg2[%c0_22, %c0_23] : memref<128x512xbf16, #tpu.memory_space<vmem>>, vector<128x512xbf16>
    %cst_24 = arith.constant 0.000000e+00 : f32
    %40 = vector.broadcast %cst_24 : f32 to vector<16x128xf32>
    %cst_25 = arith.constant 0.000000e+00 : f32
    %41 = vector.broadcast %cst_25 : f32 to vector<16x128xf32>
    %c0_i32 = arith.constant 0 : i32
    %42 = arith.index_cast %c0_i32 : i32 to index
    %c0_26 = arith.constant 0 : index
    %c0_27 = arith.constant 0 : index
    %43 = vector.load %arg9[%42, %c0_26, %c0_27] : memref<8x16x512xbf16, #tpu.memory_space<vmem>>, vector<1x16x512xbf16>
    %44 = vector.shape_cast %43 : vector<1x16x512xbf16> to vector<16x512xbf16>
    %45 = arith.extf %44 : vector<16x512xbf16> to vector<16x512xf32>
    %46 = arith.truncf %40 : vector<16x128xf32> to vector<16x128xbf16>
    %cst_28 = arith.constant dense<0.000000e+00> : vector<16x512xf32>
    %47 = tpu.matmul %46, %39, %cst_28 {dimension_numbers = #tpu.dot_dimension_numbers<[1], [0], [0], [1], [0, 0, 1, 1], [], []>} : vector<16x128xbf16>, vector<128x512xbf16>, vector<16x512xf32> -> vector<16x512xf32>
    %48 = arith.addf %45, %47 : vector<16x512xf32>
    %49 = vector.extract_strided_slice %48 {offsets = [0, 0], sizes = [16, 128], strides = [1, 1]} : vector<16x512xf32> to vector<16x128xf32>
    %50 = arith.negf %49 : vector<16x128xf32>
    %51 = math.exp %50 : vector<16x128xf32>
    %cst_29 = arith.constant 1.000000e+00 : f32
    %52 = vector.broadcast %cst_29 : f32 to vector<16x128xf32>
    %53 = arith.addf %52, %51 : vector<16x128xf32>
    %54 = arith.divf %52, %53 : vector<16x128xf32>
    %55 = vector.extract_strided_slice %48 {offsets = [0, 128], sizes = [16, 128], strides = [1, 1]} : vector<16x512xf32> to vector<16x128xf32>
    %56 = arith.negf %55 : vector<16x128xf32>
    %57 = math.exp %56 : vector<16x128xf32>
    %cst_30 = arith.constant 1.000000e+00 : f32
    %58 = vector.broadcast %cst_30 : f32 to vector<16x128xf32>
    %59 = arith.addf %58, %57 : vector<16x128xf32>
    %60 = arith.divf %58, %59 : vector<16x128xf32>
    %61 = vector.extract_strided_slice %48 {offsets = [0, 256], sizes = [16, 128], strides = [1, 1]} : vector<16x512xf32> to vector<16x128xf32>
    %62 = math.tanh %61 : vector<16x128xf32>
    %63 = vector.extract_strided_slice %48 {offsets = [0, 384], sizes = [16, 128], strides = [1, 1]} : vector<16x512xf32> to vector<16x128xf32>
    %64 = arith.negf %63 : vector<16x128xf32>
    %65 = math.exp %64 : vector<16x128xf32>
    %cst_31 = arith.constant 1.000000e+00 : f32
    %66 = vector.broadcast %cst_31 : f32 to vector<16x128xf32>
    %67 = arith.addf %66, %65 : vector<16x128xf32>
    %68 = arith.divf %66, %67 : vector<16x128xf32>
    %69 = arith.mulf %60, %41 : vector<16x128xf32>
    %70 = arith.mulf %54, %62 : vector<16x128xf32>
    %71 = arith.addf %69, %70 : vector<16x128xf32>
    %72 = math.tanh %71 : vector<16x128xf32>
    %73 = arith.mulf %68, %72 : vector<16x128xf32>
    %c1_i32 = arith.constant 1 : i32
    %74 = arith.index_cast %c1_i32 : i32 to index
    %c0_32 = arith.constant 0 : index
    %c0_33 = arith.constant 0 : index
    %75 = vector.load %arg9[%74, %c0_32, %c0_33] : memref<8x16x512xbf16, #tpu.memory_space<vmem>>, vector<1x16x512xbf16>
    %76 = vector.shape_cast %75 : vector<1x16x512xbf16> to vector<16x512xbf16>
    %77 = arith.extf %76 : vector<16x512xbf16> to vector<16x512xf32>
    %78 = arith.truncf %73 : vector<16x128xf32> to vector<16x128xbf16>
    %cst_34 = arith.constant dense<0.000000e+00> : vector<16x512xf32>
    %79 = tpu.matmul %78, %39, %cst_34 {dimension_numbers = #tpu.dot_dimension_numbers<[1], [0], [0], [1], [0, 0, 1, 1], [], []>} : vector<16x128xbf16>, vector<128x512xbf16>, vector<16x512xf32> -> vector<16x512xf32>
    %80 = arith.addf %77, %79 : vector<16x512xf32>
    %81 = vector.extract_strided_slice %80 {offsets = [0, 0], sizes = [16, 128], strides = [1, 1]} : vector<16x512xf32> to vector<16x128xf32>
    %82 = arith.negf %81 : vector<16x128xf32>
    %83 = math.exp %82 : vector<16x128xf32>
    %cst_35 = arith.constant 1.000000e+00 : f32
    %84 = vector.broadcast %cst_35 : f32 to vector<16x128xf32>
    %85 = arith.addf %84, %83 : vector<16x128xf32>
    %86 = arith.divf %84, %85 : vector<16x128xf32>
    %87 = vector.extract_strided_slice %80 {offsets = [0, 128], sizes = [16, 128], strides = [1, 1]} : vector<16x512xf32> to vector<16x128xf32>
    %88 = arith.negf %87 : vector<16x128xf32>
    %89 = math.exp %88 : vector<16x128xf32>
    %cst_36 = arith.constant 1.000000e+00 : f32
    %90 = vector.broadcast %cst_36 : f32 to vector<16x128xf32>
    %91 = arith.addf %90, %89 : vector<16x128xf32>
    %92 = arith.divf %90, %91 : vector<16x128xf32>
    %93 = vector.extract_strided_slice %80 {offsets = [0, 256], sizes = [16, 128], strides = [1, 1]} : vector<16x512xf32> to vector<16x128xf32>
    %94 = math.tanh %93 : vector<16x128xf32>
    %95 = vector.extract_strided_slice %80 {offsets = [0, 384], sizes = [16, 128], strides = [1, 1]} : vector<16x512xf32> to vector<16x128xf32>
    %96 = arith.negf %95 : vector<16x128xf32>
    %97 = math.exp %96 : vector<16x128xf32>
    %cst_37 = arith.constant 1.000000e+00 : f32
    %98 = vector.broadcast %cst_37 : f32 to vector<16x128xf32>
    %99 = arith.addf %98, %97 : vector<16x128xf32>
    %100 = arith.divf %98, %99 : vector<16x128xf32>
    %101 = arith.mulf %92, %71 : vector<16x128xf32>
    %102 = arith.mulf %86, %94 : vector<16x128xf32>
    %103 = arith.addf %101, %102 : vector<16x128xf32>
    %104 = math.tanh %103 : vector<16x128xf32>
    %105 = arith.mulf %100, %104 : vector<16x128xf32>
    %c2_i32 = arith.constant 2 : i32
    %106 = arith.index_cast %c2_i32 : i32 to index
    %c0_38 = arith.constant 0 : index
    %c0_39 = arith.constant 0 : index
    %107 = vector.load %arg9[%106, %c0_38, %c0_39] : memref<8x16x512xbf16, #tpu.memory_space<vmem>>, vector<1x16x512xbf16>
    %108 = vector.shape_cast %107 : vector<1x16x512xbf16> to vector<16x512xbf16>
    %109 = arith.extf %108 : vector<16x512xbf16> to vector<16x512xf32>
    %110 = arith.truncf %105 : vector<16x128xf32> to vector<16x128xbf16>
    %cst_40 = arith.constant dense<0.000000e+00> : vector<16x512xf32>
    %111 = tpu.matmul %110, %39, %cst_40 {dimension_numbers = #tpu.dot_dimension_numbers<[1], [0], [0], [1], [0, 0, 1, 1], [], []>} : vector<16x128xbf16>, vector<128x512xbf16>, vector<16x512xf32> -> vector<16x512xf32>
    %112 = arith.addf %109, %111 : vector<16x512xf32>
    %113 = vector.extract_strided_slice %112 {offsets = [0, 0], sizes = [16, 128], strides = [1, 1]} : vector<16x512xf32> to vector<16x128xf32>
    %114 = arith.negf %113 : vector<16x128xf32>
    %115 = math.exp %114 : vector<16x128xf32>
    %cst_41 = arith.constant 1.000000e+00 : f32
    %116 = vector.broadcast %cst_41 : f32 to vector<16x128xf32>
    %117 = arith.addf %116, %115 : vector<16x128xf32>
    %118 = arith.divf %116, %117 : vector<16x128xf32>
    %119 = vector.extract_strided_slice %112 {offsets = [0, 128], sizes = [16, 128], strides = [1, 1]} : vector<16x512xf32> to vector<16x128xf32>
    %120 = arith.negf %119 : vector<16x128xf32>
    %121 = math.exp %120 : vector<16x128xf32>
    %cst_42 = arith.constant 1.000000e+00 : f32
    %122 = vector.broadcast %cst_42 : f32 to vector<16x128xf32>
    %123 = arith.addf %122, %121 : vector<16x128xf32>
    %124 = arith.divf %122, %123 : vector<16x128xf32>
    %125 = vector.extract_strided_slice %112 {offsets = [0, 256], sizes = [16, 128], strides = [1, 1]} : vector<16x512xf32> to vector<16x128xf32>
    %126 = math.tanh %125 : vector<16x128xf32>
    %127 = vector.extract_strided_slice %112 {offsets = [0, 384], sizes = [16, 128], strides = [1, 1]} : vector<16x512xf32> to vector<16x128xf32>
    %128 = arith.negf %127 : vector<16x128xf32>
    %129 = math.exp %128 : vector<16x128xf32>
    %cst_43 = arith.constant 1.000000e+00 : f32
    %130 = vector.broadcast %cst_43 : f32 to vector<16x128xf32>
    %131 = arith.addf %130, %129 : vector<16x128xf32>
    %132 = arith.divf %130, %131 : vector<16x128xf32>
    %133 = arith.mulf %124, %103 : vector<16x128xf32>
    %134 = arith.mulf %118, %126 : vector<16x128xf32>
    %135 = arith.addf %133, %134 : vector<16x128xf32>
    %136 = math.tanh %135 : vector<16x128xf32>
    %137 = arith.mulf %132, %136 : vector<16x128xf32>
    %c3_i32 = arith.constant 3 : i32
    %138 = arith.index_cast %c3_i32 : i32 to index
    %c0_44 = arith.constant 0 : index
    %c0_45 = arith.constant 0 : index
    %139 = vector.load %arg9[%138, %c0_44, %c0_45] : memref<8x16x512xbf16, #tpu.memory_space<vmem>>, vector<1x16x512xbf16>
    %140 = vector.shape_cast %139 : vector<1x16x512xbf16> to vector<16x512xbf16>
    %141 = arith.extf %140 : vector<16x512xbf16> to vector<16x512xf32>
    %142 = arith.truncf %137 : vector<16x128xf32> to vector<16x128xbf16>
    %cst_46 = arith.constant dense<0.000000e+00> : vector<16x512xf32>
    %143 = tpu.matmul %142, %39, %cst_46 {dimension_numbers = #tpu.dot_dimension_numbers<[1], [0], [0], [1], [0, 0, 1, 1], [], []>} : vector<16x128xbf16>, vector<128x512xbf16>, vector<16x512xf32> -> vector<16x512xf32>
    %144 = arith.addf %141, %143 : vector<16x512xf32>
    %145 = vector.extract_strided_slice %144 {offsets = [0, 0], sizes = [16, 128], strides = [1, 1]} : vector<16x512xf32> to vector<16x128xf32>
    %146 = arith.negf %145 : vector<16x128xf32>
    %147 = math.exp %146 : vector<16x128xf32>
    %cst_47 = arith.constant 1.000000e+00 : f32
    %148 = vector.broadcast %cst_47 : f32 to vector<16x128xf32>
    %149 = arith.addf %148, %147 : vector<16x128xf32>
    %150 = arith.divf %148, %149 : vector<16x128xf32>
    %151 = vector.extract_strided_slice %144 {offsets = [0, 128], sizes = [16, 128], strides = [1, 1]} : vector<16x512xf32> to vector<16x128xf32>
    %152 = arith.negf %151 : vector<16x128xf32>
    %153 = math.exp %152 : vector<16x128xf32>
    %cst_48 = arith.constant 1.000000e+00 : f32
    %154 = vector.broadcast %cst_48 : f32 to vector<16x128xf32>
    %155 = arith.addf %154, %153 : vector<16x128xf32>
    %156 = arith.divf %154, %155 : vector<16x128xf32>
    %157 = vector.extract_strided_slice %144 {offsets = [0, 256], sizes = [16, 128], strides = [1, 1]} : vector<16x512xf32> to vector<16x128xf32>
    %158 = math.tanh %157 : vector<16x128xf32>
    %159 = vector.extract_strided_slice %144 {offsets = [0, 384], sizes = [16, 128], strides = [1, 1]} : vector<16x512xf32> to vector<16x128xf32>
    %160 = arith.negf %159 : vector<16x128xf32>
    %161 = math.exp %160 : vector<16x128xf32>
    %cst_49 = arith.constant 1.000000e+00 : f32
    %162 = vector.broadcast %cst_49 : f32 to vector<16x128xf32>
    %163 = arith.addf %162, %161 : vector<16x128xf32>
    %164 = arith.divf %162, %163 : vector<16x128xf32>
    %165 = arith.mulf %156, %135 : vector<16x128xf32>
    %166 = arith.mulf %150, %158 : vector<16x128xf32>
    %167 = arith.addf %165, %166 : vector<16x128xf32>
    %168 = math.tanh %167 : vector<16x128xf32>
    %169 = arith.mulf %164, %168 : vector<16x128xf32>
    %c4_i32 = arith.constant 4 : i32
    %170 = arith.index_cast %c4_i32 : i32 to index
    %c0_50 = arith.constant 0 : index
    %c0_51 = arith.constant 0 : index
    %171 = vector.load %arg9[%170, %c0_50, %c0_51] : memref<8x16x512xbf16, #tpu.memory_space<vmem>>, vector<1x16x512xbf16>
    %172 = vector.shape_cast %171 : vector<1x16x512xbf16> to vector<16x512xbf16>
    %173 = arith.extf %172 : vector<16x512xbf16> to vector<16x512xf32>
    %174 = arith.truncf %169 : vector<16x128xf32> to vector<16x128xbf16>
    %cst_52 = arith.constant dense<0.000000e+00> : vector<16x512xf32>
    %175 = tpu.matmul %174, %39, %cst_52 {dimension_numbers = #tpu.dot_dimension_numbers<[1], [0], [0], [1], [0, 0, 1, 1], [], []>} : vector<16x128xbf16>, vector<128x512xbf16>, vector<16x512xf32> -> vector<16x512xf32>
    %176 = arith.addf %173, %175 : vector<16x512xf32>
    %177 = vector.extract_strided_slice %176 {offsets = [0, 0], sizes = [16, 128], strides = [1, 1]} : vector<16x512xf32> to vector<16x128xf32>
    %178 = arith.negf %177 : vector<16x128xf32>
    %179 = math.exp %178 : vector<16x128xf32>
    %cst_53 = arith.constant 1.000000e+00 : f32
    %180 = vector.broadcast %cst_53 : f32 to vector<16x128xf32>
    %181 = arith.addf %180, %179 : vector<16x128xf32>
    %182 = arith.divf %180, %181 : vector<16x128xf32>
    %183 = vector.extract_strided_slice %176 {offsets = [0, 128], sizes = [16, 128], strides = [1, 1]} : vector<16x512xf32> to vector<16x128xf32>
    %184 = arith.negf %183 : vector<16x128xf32>
    %185 = math.exp %184 : vector<16x128xf32>
    %cst_54 = arith.constant 1.000000e+00 : f32
    %186 = vector.broadcast %cst_54 : f32 to vector<16x128xf32>
    %187 = arith.addf %186, %185 : vector<16x128xf32>
    %188 = arith.divf %186, %187 : vector<16x128xf32>
    %189 = vector.extract_strided_slice %176 {offsets = [0, 256], sizes = [16, 128], strides = [1, 1]} : vector<16x512xf32> to vector<16x128xf32>
    %190 = math.tanh %189 : vector<16x128xf32>
    %191 = vector.extract_strided_slice %176 {offsets = [0, 384], sizes = [16, 128], strides = [1, 1]} : vector<16x512xf32> to vector<16x128xf32>
    %192 = arith.negf %191 : vector<16x128xf32>
    %193 = math.exp %192 : vector<16x128xf32>
    %cst_55 = arith.constant 1.000000e+00 : f32
    %194 = vector.broadcast %cst_55 : f32 to vector<16x128xf32>
    %195 = arith.addf %194, %193 : vector<16x128xf32>
    %196 = arith.divf %194, %195 : vector<16x128xf32>
    %197 = arith.mulf %188, %167 : vector<16x128xf32>
    %198 = arith.mulf %182, %190 : vector<16x128xf32>
    %199 = arith.addf %197, %198 : vector<16x128xf32>
    %200 = math.tanh %199 : vector<16x128xf32>
    %201 = arith.mulf %196, %200 : vector<16x128xf32>
    %c5_i32 = arith.constant 5 : i32
    %202 = arith.index_cast %c5_i32 : i32 to index
    %c0_56 = arith.constant 0 : index
    %c0_57 = arith.constant 0 : index
    %203 = vector.load %arg9[%202, %c0_56, %c0_57] : memref<8x16x512xbf16, #tpu.memory_space<vmem>>, vector<1x16x512xbf16>
    %204 = vector.shape_cast %203 : vector<1x16x512xbf16> to vector<16x512xbf16>
    %205 = arith.extf %204 : vector<16x512xbf16> to vector<16x512xf32>
    %206 = arith.truncf %201 : vector<16x128xf32> to vector<16x128xbf16>
    %cst_58 = arith.constant dense<0.000000e+00> : vector<16x512xf32>
    %207 = tpu.matmul %206, %39, %cst_58 {dimension_numbers = #tpu.dot_dimension_numbers<[1], [0], [0], [1], [0, 0, 1, 1], [], []>} : vector<16x128xbf16>, vector<128x512xbf16>, vector<16x512xf32> -> vector<16x512xf32>
    %208 = arith.addf %205, %207 : vector<16x512xf32>
    %209 = vector.extract_strided_slice %208 {offsets = [0, 0], sizes = [16, 128], strides = [1, 1]} : vector<16x512xf32> to vector<16x128xf32>
    %210 = arith.negf %209 : vector<16x128xf32>
    %211 = math.exp %210 : vector<16x128xf32>
    %cst_59 = arith.constant 1.000000e+00 : f32
    %212 = vector.broadcast %cst_59 : f32 to vector<16x128xf32>
    %213 = arith.addf %212, %211 : vector<16x128xf32>
    %214 = arith.divf %212, %213 : vector<16x128xf32>
    %215 = vector.extract_strided_slice %208 {offsets = [0, 128], sizes = [16, 128], strides = [1, 1]} : vector<16x512xf32> to vector<16x128xf32>
    %216 = arith.negf %215 : vector<16x128xf32>
    %217 = math.exp %216 : vector<16x128xf32>
    %cst_60 = arith.constant 1.000000e+00 : f32
    %218 = vector.broadcast %cst_60 : f32 to vector<16x128xf32>
    %219 = arith.addf %218, %217 : vector<16x128xf32>
    %220 = arith.divf %218, %219 : vector<16x128xf32>
    %221 = vector.extract_strided_slice %208 {offsets = [0, 256], sizes = [16, 128], strides = [1, 1]} : vector<16x512xf32> to vector<16x128xf32>
    %222 = math.tanh %221 : vector<16x128xf32>
    %223 = vector.extract_strided_slice %208 {offsets = [0, 384], sizes = [16, 128], strides = [1, 1]} : vector<16x512xf32> to vector<16x128xf32>
    %224 = arith.negf %223 : vector<16x128xf32>
    %225 = math.exp %224 : vector<16x128xf32>
    %cst_61 = arith.constant 1.000000e+00 : f32
    %226 = vector.broadcast %cst_61 : f32 to vector<16x128xf32>
    %227 = arith.addf %226, %225 : vector<16x128xf32>
    %228 = arith.divf %226, %227 : vector<16x128xf32>
    %229 = arith.mulf %220, %199 : vector<16x128xf32>
    %230 = arith.mulf %214, %222 : vector<16x128xf32>
    %231 = arith.addf %229, %230 : vector<16x128xf32>
    %232 = math.tanh %231 : vector<16x128xf32>
    %233 = arith.mulf %228, %232 : vector<16x128xf32>
    %c6_i32 = arith.constant 6 : i32
    %234 = arith.index_cast %c6_i32 : i32 to index
    %c0_62 = arith.constant 0 : index
    %c0_63 = arith.constant 0 : index
    %235 = vector.load %arg9[%234, %c0_62, %c0_63] : memref<8x16x512xbf16, #tpu.memory_space<vmem>>, vector<1x16x512xbf16>
    %236 = vector.shape_cast %235 : vector<1x16x512xbf16> to vector<16x512xbf16>
    %237 = arith.extf %236 : vector<16x512xbf16> to vector<16x512xf32>
    %238 = arith.truncf %233 : vector<16x128xf32> to vector<16x128xbf16>
    %cst_64 = arith.constant dense<0.000000e+00> : vector<16x512xf32>
    %239 = tpu.matmul %238, %39, %cst_64 {dimension_numbers = #tpu.dot_dimension_numbers<[1], [0], [0], [1], [0, 0, 1, 1], [], []>} : vector<16x128xbf16>, vector<128x512xbf16>, vector<16x512xf32> -> vector<16x512xf32>
    %240 = arith.addf %237, %239 : vector<16x512xf32>
    %241 = vector.extract_strided_slice %240 {offsets = [0, 0], sizes = [16, 128], strides = [1, 1]} : vector<16x512xf32> to vector<16x128xf32>
    %242 = arith.negf %241 : vector<16x128xf32>
    %243 = math.exp %242 : vector<16x128xf32>
    %cst_65 = arith.constant 1.000000e+00 : f32
    %244 = vector.broadcast %cst_65 : f32 to vector<16x128xf32>
    %245 = arith.addf %244, %243 : vector<16x128xf32>
    %246 = arith.divf %244, %245 : vector<16x128xf32>
    %247 = vector.extract_strided_slice %240 {offsets = [0, 128], sizes = [16, 128], strides = [1, 1]} : vector<16x512xf32> to vector<16x128xf32>
    %248 = arith.negf %247 : vector<16x128xf32>
    %249 = math.exp %248 : vector<16x128xf32>
    %cst_66 = arith.constant 1.000000e+00 : f32
    %250 = vector.broadcast %cst_66 : f32 to vector<16x128xf32>
    %251 = arith.addf %250, %249 : vector<16x128xf32>
    %252 = arith.divf %250, %251 : vector<16x128xf32>
    %253 = vector.extract_strided_slice %240 {offsets = [0, 256], sizes = [16, 128], strides = [1, 1]} : vector<16x512xf32> to vector<16x128xf32>
    %254 = math.tanh %253 : vector<16x128xf32>
    %255 = vector.extract_strided_slice %240 {offsets = [0, 384], sizes = [16, 128], strides = [1, 1]} : vector<16x512xf32> to vector<16x128xf32>
    %256 = arith.negf %255 : vector<16x128xf32>
    %257 = math.exp %256 : vector<16x128xf32>
    %cst_67 = arith.constant 1.000000e+00 : f32
    %258 = vector.broadcast %cst_67 : f32 to vector<16x128xf32>
    %259 = arith.addf %258, %257 : vector<16x128xf32>
    %260 = arith.divf %258, %259 : vector<16x128xf32>
    %261 = arith.mulf %252, %231 : vector<16x128xf32>
    %262 = arith.mulf %246, %254 : vector<16x128xf32>
    %263 = arith.addf %261, %262 : vector<16x128xf32>
    %264 = math.tanh %263 : vector<16x128xf32>
    %265 = arith.mulf %260, %264 : vector<16x128xf32>
    %c7_i32 = arith.constant 7 : i32
    %266 = arith.index_cast %c7_i32 : i32 to index
    %c0_68 = arith.constant 0 : index
    %c0_69 = arith.constant 0 : index
    %267 = vector.load %arg9[%266, %c0_68, %c0_69] : memref<8x16x512xbf16, #tpu.memory_space<vmem>>, vector<1x16x512xbf16>
    %268 = vector.shape_cast %267 : vector<1x16x512xbf16> to vector<16x512xbf16>
    %269 = arith.extf %268 : vector<16x512xbf16> to vector<16x512xf32>
    %270 = arith.truncf %265 : vector<16x128xf32> to vector<16x128xbf16>
    %cst_70 = arith.constant dense<0.000000e+00> : vector<16x512xf32>
    %271 = tpu.matmul %270, %39, %cst_70 {dimension_numbers = #tpu.dot_dimension_numbers<[1], [0], [0], [1], [0, 0, 1, 1], [], []>} : vector<16x128xbf16>, vector<128x512xbf16>, vector<16x512xf32> -> vector<16x512xf32>
    %272 = arith.addf %269, %271 : vector<16x512xf32>
    %273 = vector.extract_strided_slice %272 {offsets = [0, 0], sizes = [16, 128], strides = [1, 1]} : vector<16x512xf32> to vector<16x128xf32>
    %274 = arith.negf %273 : vector<16x128xf32>
    %275 = math.exp %274 : vector<16x128xf32>
    %cst_71 = arith.constant 1.000000e+00 : f32
    %276 = vector.broadcast %cst_71 : f32 to vector<16x128xf32>
    %277 = arith.addf %276, %275 : vector<16x128xf32>
    %278 = arith.divf %276, %277 : vector<16x128xf32>
    %279 = vector.extract_strided_slice %272 {offsets = [0, 128], sizes = [16, 128], strides = [1, 1]} : vector<16x512xf32> to vector<16x128xf32>
    %280 = arith.negf %279 : vector<16x128xf32>
    %281 = math.exp %280 : vector<16x128xf32>
    %cst_72 = arith.constant 1.000000e+00 : f32
    %282 = vector.broadcast %cst_72 : f32 to vector<16x128xf32>
    %283 = arith.addf %282, %281 : vector<16x128xf32>
    %284 = arith.divf %282, %283 : vector<16x128xf32>
    %285 = vector.extract_strided_slice %272 {offsets = [0, 256], sizes = [16, 128], strides = [1, 1]} : vector<16x512xf32> to vector<16x128xf32>
    %286 = math.tanh %285 : vector<16x128xf32>
    %287 = vector.extract_strided_slice %272 {offsets = [0, 384], sizes = [16, 128], strides = [1, 1]} : vector<16x512xf32> to vector<16x128xf32>
    %288 = arith.negf %287 : vector<16x128xf32>
    %289 = math.exp %288 : vector<16x128xf32>
    %cst_73 = arith.constant 1.000000e+00 : f32
    %290 = vector.broadcast %cst_73 : f32 to vector<16x128xf32>
    %291 = arith.addf %290, %289 : vector<16x128xf32>
    %292 = arith.divf %290, %291 : vector<16x128xf32>
    %293 = arith.mulf %284, %263 : vector<16x128xf32>
    %294 = arith.mulf %278, %286 : vector<16x128xf32>
    %295 = arith.addf %293, %294 : vector<16x128xf32>
    %296 = math.tanh %295 : vector<16x128xf32>
    %297 = arith.mulf %292, %296 : vector<16x128xf32>
    %c8_i32 = arith.constant 8 : i32
    %298 = arith.truncf %297 : vector<16x128xf32> to vector<16x128xbf16>
    %c0_74 = arith.constant 0 : index
    %c0_75 = arith.constant 0 : index
    %299 = vector.load %arg4[%c0_74, %c0_75] : memref<128x128xbf16, #tpu.memory_space<vmem>>, vector<128x128xbf16>
    %cst_76 = arith.constant dense<0.000000e+00> : vector<16x128xf32>
    %300 = tpu.matmul %298, %299, %cst_76 {dimension_numbers = #tpu.dot_dimension_numbers<[1], [0], [0], [1], [0, 0, 1, 1], [], []>} : vector<16x128xbf16>, vector<128x128xbf16>, vector<16x128xf32> -> vector<16x128xf32>
    %c0_77 = arith.constant 0 : index
    %c0_78 = arith.constant 0 : index
    %301 = vector.load %arg5[%c0_77, %c0_78] : memref<1x128xf32, #tpu.memory_space<vmem>>, vector<1x128xf32>
    %302 = vector.broadcast %301 : vector<1x128xf32> to vector<16x128xf32>
    %303 = arith.addf %300, %302 : vector<16x128xf32>
    %304 = arith.negf %303 : vector<16x128xf32>
    %305 = math.exp %304 : vector<16x128xf32>
    %cst_79 = arith.constant 1.000000e+00 : f32
    %306 = vector.broadcast %cst_79 : f32 to vector<16x128xf32>
    %307 = arith.addf %306, %305 : vector<16x128xf32>
    %308 = arith.divf %306, %307 : vector<16x128xf32>
    %c0_80 = arith.constant 0 : index
    %c0_81 = arith.constant 0 : index
    %309 = vector.load %arg6[%c0_80, %c0_81] : memref<16x128xf32, #tpu.memory_space<vmem>>, vector<16x128xf32>
    tpu.vector_store %arg6[%c0_80, %c0_81], %308 {strides = array<i32>} : memref<16x128xf32, #tpu.memory_space<vmem>>, vector<16x128xf32>,
    %c0_82 = arith.constant 0 : index
    %c0_83 = arith.constant 0 : index
    %310 = vector.load %arg7[%c0_82, %c0_83] : memref<16x128xf32, #tpu.memory_space<vmem>>, vector<16x128xf32>
    tpu.vector_store %arg7[%c0_82, %c0_83], %297 {strides = array<i32>} : memref<16x128xf32, #tpu.memory_space<vmem>>, vector<16x128xf32>,
    %c0_84 = arith.constant 0 : index
    %c0_85 = arith.constant 0 : index
    %311 = vector.load %arg8[%c0_84, %c0_85] : memref<16x128xf32, #tpu.memory_space<vmem>>, vector<16x128xf32>
    tpu.vector_store %arg8[%c0_84, %c0_85], %295 {strides = array<i32>} : memref<16x128xf32, #tpu.memory_space<vmem>>, vector<16x128xf32>,
    return
  }
}

</mosaic_0001>

<llo_original>
// kernel: tpu_custom_call.1
$region0: #{tpu_custom_call.1}
  #allocation0 [shape = 'u32[]', space=smem, size = 0x4, offset = 0x4, fixed_abs, tag = 'smem constant byte address 0x4 - core index']
  #allocation1 [shape = 'u32[144,128]{1,0:T(1,128)}', space=vmem, size = 0x12000, scoped, tag = 'internal scratch']
  #allocation2 [shape = 'bf16[8,16,512]{2,1,0:T(16,128)(2,1)}', space=vmem, size = 0x20000, scoped, tag = 'scratch operand']
  %s0 = inlined_call_operand.hbm [shape: bf16[128,128], index: 0, kind: input, shape index: {}]
  %s1 = inlined_call_operand.hbm [shape: bf16[128,512], index: 1, kind: input, shape index: {}]
  %s2 = inlined_call_operand.hbm [shape: bf16[128,512], index: 2, kind: input, shape index: {}]
  %s3 = inlined_call_operand.vmem [shape: f32[1,512], index: 3, kind: input, shape index: {}]
  %s4 = inlined_call_operand.hbm [shape: bf16[128,128], index: 4, kind: input, shape index: {}]
  %s5 = inlined_call_operand.vmem [shape: f32[1,128], index: 5, kind: input, shape index: {}]
  %s6 = inlined_call_operand.hbm [shape: f32[16,128], index: 6, kind: output, shape index: {0}]
  %s7 = inlined_call_operand.hbm [shape: f32[16,128], index: 7, kind: output, shape index: {1}]
  %s8 = inlined_call_operand.hbm [shape: f32[16,128], index: 8, kind: output, shape index: {2}]
  %9 = xla_tuple %s6, %s7, %s8
  %s10 = sld [smem:[#allocation0]]
  $region66: #{tpu_custom_call.1} parent=0
    _
  %s12 = ssub.s32 1, %s10
  %s13 = scalar_select 0, %s12, %s10
  $region1: #{tpu_custom_call.1} parent=0
    #allocation3 [shape = 'u8[32768]{0}', space=vmem, size = 0x8000, scoped, tag = 'input window, operand 0, single buffered']
    #allocation4 [shape = 's32[1]{0}', space=sflag, size = 0x4, scoped, tag = 'scoped memory for tpu_custom_call.1']
    #allocation5 [shape = 's32[1]{0}', space=sflag, size = 0x4, scoped, tag = 'scoped memory for tpu_custom_call.1']
    #allocation6 [shape = 'u8[131072]{0}', space=vmem, size = 0x20000, scoped, tag = 'input window, operand 1, single buffered']
    #allocation7 [shape = 's32[1]{0}', space=sflag, size = 0x4, scoped, tag = 'scoped memory for tpu_custom_call.1']
    #allocation8 [shape = 'u8[131072]{0}', space=vmem, size = 0x20000, scoped, tag = 'input window, operand 2, single buffered']
    #allocation9 [shape = 'u8[32768]{0}', space=vmem, size = 0x8000, scoped, tag = 'input window, operand 4, single buffered']
    #allocation10 [shape = 's32[1]{0}', space=sflag, size = 0x4, scoped, tag = 'scoped memory for tpu_custom_call.1']
    #allocation11 [shape = 'u8[8192]{0}', space=vmem, size = 0x2000, scoped, tag = 'output window, operand 0, single buffered']
    #allocation12 [shape = 'u8[8192]{0}', space=vmem, size = 0x2000, scoped, tag = 'output window, operand 1, single buffered']
    #allocation13 [shape = 's32[1]{0}', space=sflag, size = 0x4, scoped, tag = 'scoped memory for tpu_custom_call.1']
    #allocation14 [shape = 'u8[8192]{0}', space=vmem, size = 0x2000, scoped, tag = 'output window, operand 2, single buffered']
    %14 = vsyncpa [#allocation4], 0
    %15 = vsyncpa [#allocation7], 0
    %16 = vsyncpa [#allocation10], 0
    %17 = vsyncpa [#allocation5], 0
    %18 = vsyncpa [#allocation13], 0
    // Predicated region
    $region2: #{tpu_custom_call.1} parent=1 // pred_check
      _
    $region3: #{tpu_custom_call.1} parent=1 // pred_check_branch
      %20 = sbr.rel (0) target = $region5
    $region4: #{tpu_custom_call.1} parent=1 // pred_region
      %s22 = ssub.s32 1024, 1024
      %23 = vsyncadd [#allocation4], %s22
      %s24 = sshll.u32 [#allocation3], 4
      %s25 = int_to_ptr.vmem [resolvable:$true] %s24
      %30 = dma.hbm_to_vmem [thread:$0]  %s0, 1024, %s25, [#allocation4], 64, 64, 4
    $region5: #{tpu_custom_call.1} parent=1 // pred_fallthru
      _
    // Predicated region
    $region6: #{tpu_custom_call.1} parent=1 // pred_check
      _
    $region7: #{tpu_custom_call.1} parent=1 // pred_check_branch
      %32 = sbr.rel (0) target = $region9
    $region8: #{tpu_custom_call.1} parent=1 // pred_region
      %s34 = ssub.s32 4096, 4096
      %35 = vsyncadd [#allocation7], %s34
      %s36 = sshll.u32 [#allocation6], 4
      %s37 = int_to_ptr.vmem [resolvable:$true] %s36
      %42 = dma.hbm_to_vmem [thread:$0]  %s1, 4096, %s37, [#allocation7], 256, 256, 16
    $region9: #{tpu_custom_call.1} parent=1 // pred_fallthru
      _
    // Predicated region
    $region10: #{tpu_custom_call.1} parent=1 // pred_check
      _
    $region11: #{tpu_custom_call.1} parent=1 // pred_check_branch
      %44 = sbr.rel (0) target = $region13
    $region12: #{tpu_custom_call.1} parent=1 // pred_region
      %s46 = ssub.s32 4096, 4096
      %47 = vsyncadd [#allocation7], %s46
      %s48 = sshll.u32 [#allocation8], 4
      %s49 = int_to_ptr.vmem [resolvable:$true] %s48
      %54 = dma.hbm_to_vmem [thread:$0]  %s2, 4096, %s49, [#allocation7], 256, 256, 16
    $region13: #{tpu_custom_call.1} parent=1 // pred_fallthru
      _
    // Predicated region
    $region14: #{tpu_custom_call.1} parent=1 // pred_check
      _
    $region15: #{tpu_custom_call.1} parent=1 // pred_check_branch
      %56 = sbr.rel (0) target = $region17
    $region16: #{tpu_custom_call.1} parent=1 // pred_region
      _
    $region17: #{tpu_custom_call.1} parent=1 // pred_fallthru
      _
    // Predicated region
    $region18: #{tpu_custom_call.1} parent=1 // pred_check
      _
    $region19: #{tpu_custom_call.1} parent=1 // pred_check_branch
      %58 = sbr.rel (0) target = $region21
    $region20: #{tpu_custom_call.1} parent=1 // pred_region
      %s60 = ssub.s32 1024, 1024
      %61 = vsyncadd [#allocation10], %s60
      %s62 = sshll.u32 [#allocation9], 4
      %s63 = int_to_ptr.vmem [resolvable:$true] %s62
      %68 = dma.hbm_to_vmem [thread:$0]  %s4, 1024, %s63, [#allocation10], 64, 64, 4
    $region21: #{tpu_custom_call.1} parent=1 // pred_fallthru
      _
    // Predicated region
    $region22: #{tpu_custom_call.1} parent=1 // pred_check
      _
    $region23: #{tpu_custom_call.1} parent=1 // pred_check_branch
      %70 = sbr.rel (0) target = $region25
    $region24: #{tpu_custom_call.1} parent=1 // pred_region
      _
    $region25: #{tpu_custom_call.1} parent=1 // pred_fallthru
      _
    // Predicated region
    $region26: #{tpu_custom_call.1} parent=1 // pred_check
      _
    $region27: #{tpu_custom_call.1} parent=1 // pred_check_branch
      %72 = sbr.rel (0) target = $region29
    $region28: #{tpu_custom_call.1} parent=1 // pred_region
      %73 = dma.done [#allocation4], 1024
    $region29: #{tpu_custom_call.1} parent=1 // pred_fallthru
      _
    // Predicated region
    $region30: #{tpu_custom_call.1} parent=1 // pred_check
      _
    $region31: #{tpu_custom_call.1} parent=1 // pred_check_branch
      %75 = sbr.rel (0) target = $region33
    $region32: #{tpu_custom_call.1} parent=1 // pred_region
      %76 = dma.done [#allocation7], 4096
    $region33: #{tpu_custom_call.1} parent=1 // pred_fallthru
      _
    // Predicated region
    $region34: #{tpu_custom_call.1} parent=1 // pred_check
      _
    $region35: #{tpu_custom_call.1} parent=1 // pred_check_branch
      %78 = sbr.rel (0) target = $region37
    $region36: #{tpu_custom_call.1} parent=1 // pred_region
      %79 = dma.done [#allocation7], 4096
    $region37: #{tpu_custom_call.1} parent=1 // pred_fallthru
      _
    // Predicated region
    $region38: #{tpu_custom_call.1} parent=1 // pred_check
      _
    $region39: #{tpu_custom_call.1} parent=1 // pred_check_branch
      %81 = sbr.rel (0) target = $region41
    $region40: #{tpu_custom_call.1} parent=1 // pred_region
      %82 = dma.done [#allocation10], 1024
    $region41: #{tpu_custom_call.1} parent=1 // pred_fallthru
      _
    %v84 = vld [vmem:[#allocation3] sm:$0xf]
    %v85 = vld [vmem:[#allocation3 + $0x4] sm:$0xf]
    %v86 = vld [vmem:[#allocation3 + $0x8] sm:$0xf]
    %v87 = vld [vmem:[#allocation3 + $0xc] sm:$0xf]
    %v88 = vld [vmem:[#allocation3 + $0x10] sm:$0xf]
    %v89 = vld [vmem:[#allocation3 + $0x14] sm:$0xf]
    %v90 = vld [vmem:[#allocation3 + $0x18] sm:$0xf]
    %v91 = vld [vmem:[#allocation3 + $0x1c] sm:$0xf]
    %v92 = vld [vmem:[#allocation3 + $0x20] sm:$0xf]
    %v93 = vld [vmem:[#allocation3 + $0x24] sm:$0xf]
    %v94 = vld [vmem:[#allocation3 + $0x28] sm:$0xf]
    %v95 = vld [vmem:[#allocation3 + $0x2c] sm:$0xf]
    %v96 = vld [vmem:[#allocation3 + $0x30] sm:$0xf]
    %v97 = vld [vmem:[#allocation3 + $0x34] sm:$0xf]
    %v98 = vld [vmem:[#allocation3 + $0x38] sm:$0xf]
    %v99 = vld [vmem:[#allocation3 + $0x3c] sm:$0xf]
    %v100 = vld [vmem:[#allocation6] sm:$0xff]
    %v101 = vld [vmem:[#allocation6 + $0x8] sm:$0xff]
    %v102 = vld [vmem:[#allocation6 + $0x10] sm:$0xff]
    %v103 = vld [vmem:[#allocation6 + $0x18] sm:$0xff]
    %v104 = vld [vmem:[#allocation6 + $0x20] sm:$0xff]
    %v105 = vld [vmem:[#allocation6 + $0x28] sm:$0xff]
    %v106 = vld [vmem:[#allocation6 + $0x30] sm:$0xff]
    %v107 = vld [vmem:[#allocation6 + $0x38] sm:$0xff]
    %v108 = vld [vmem:[#allocation6 + $0x40] sm:$0xff]
    %v109 = vld [vmem:[#allocation6 + $0x48] sm:$0xff]
    %v110 = vld [vmem:[#allocation6 + $0x50] sm:$0xff]
    %v111 = vld [vmem:[#allocation6 + $0x58] sm:$0xff]
    %v112 = vld [vmem:[#allocation6 + $0x60] sm:$0xff]
    %v113 = vld [vmem:[#allocation6 + $0x68] sm:$0xff]
    %v114 = vld [vmem:[#allocation6 + $0x70] sm:$0xff]
    %v115 = vld [vmem:[#allocation6 + $0x78] sm:$0xff]
    %v116 = vld [vmem:[#allocation6 + $0x80] sm:$0xff]
    %v117 = vld [vmem:[#allocation6 + $0x88] sm:$0xff]
    %v118 = vld [vmem:[#allocation6 + $0x90] sm:$0xff]
    %v119 = vld [vmem:[#allocation6 + $0x98] sm:$0xff]
    %v120 = vld [vmem:[#allocation6 + $0xa0] sm:$0xff]
    %v121 = vld [vmem:[#allocation6 + $0xa8] sm:$0xff]
    %v122 = vld [vmem:[#allocation6 + $0xb0] sm:$0xff]
    %v123 = vld [vmem:[#allocation6 + $0xb8] sm:$0xff]
    %v124 = vld [vmem:[#allocation6 + $0xc0] sm:$0xff]
    %v125 = vld [vmem:[#allocation6 + $0xc8] sm:$0xff]
    %v126 = vld [vmem:[#allocation6 + $0xd0] sm:$0xff]
    %v127 = vld [vmem:[#allocation6 + $0xd8] sm:$0xff]
    %v128 = vld [vmem:[#allocation6 + $0xe0] sm:$0xff]
    %v129 = vld [vmem:[#allocation6 + $0xe8] sm:$0xff]
    %v130 = vld [vmem:[#allocation6 + $0xf0] sm:$0xff]
    %v131 = vld [vmem:[#allocation6 + $0xf8] sm:$0xff]
    %v132 = vld [vmem:[%s3] sm:$0xf]
    %v134 = vlaneseq
    %v135 = vshrl.u32 %v134, 7
    %v136 = vsub.s32 0, %v135
    %v137 = vrot.slane %v132, %v136
    %v138 = vlaneseq
    %v139 = vshrl.u32 %v138, 7
    %v140 = vsub.s32 1, %v139
    %v141 = vrot.slane %v132, %v140
    %v142 = vlaneseq
    %v143 = vshrl.u32 %v142, 7
    %v144 = vsub.s32 2, %v143
    %v145 = vrot.slane %v132, %v144
    %v146 = vlaneseq
    %v147 = vshrl.u32 %v146, 7
    %v148 = vsub.s32 3, %v147
    %v149 = vrot.slane %v132, %v148
    %v170 = vunpack.c.l.b16 %v84
    %v171 = vunpack.c.l.b16 %v85
    %v172 = vunpack.c.l.b16 %v86
    %v173 = vunpack.c.l.b16 %v87
    %v174 = vunpack.c.l.b16 %v88
    %v175 = vunpack.c.l.b16 %v89
    %v176 = vunpack.c.l.b16 %v90
    %v177 = vunpack.c.l.b16 %v91
    %v178 = vunpack.c.l.b16 %v92
    %v179 = vunpack.c.l.b16 %v93
    %v180 = vunpack.c.l.b16 %v94
    %v181 = vunpack.c.l.b16 %v95
    %v182 = vunpack.c.l.b16 %v96
    %v183 = vunpack.c.l.b16 %v97
    %v184 = vunpack.c.l.b16 %v98
    %v185 = vunpack.c.l.b16 %v99
    %v186 = vpack.c.b16 %v171, %v170
    %v187 = vpack.c.b16 %v173, %v172
    %v188 = vpack.c.b16 %v175, %v174
    %v189 = vpack.c.b16 %v177, %v176
    %v190 = vpack.c.b16 %v179, %v178
    %v191 = vpack.c.b16 %v181, %v180
    %v192 = vpack.c.b16 %v183, %v182
    %v193 = vpack.c.b16 %v185, %v184
    %v234 = vunpack.c.l.b16 %v100
    %v235 = vunpack.c.h.b16 %v100
    %v236 = vunpack.c.l.b16 %v101
    %v237 = vunpack.c.h.b16 %v101
    %v238 = vunpack.c.l.b16 %v102
    %v239 = vunpack.c.h.b16 %v102
    %v240 = vunpack.c.l.b16 %v103
    %v241 = vunpack.c.h.b16 %v103
    %v242 = vunpack.c.l.b16 %v104
    %v243 = vunpack.c.h.b16 %v104
    %v244 = vunpack.c.l.b16 %v105
    %v245 = vunpack.c.h.b16 %v105
    %v246 = vunpack.c.l.b16 %v106
    %v247 = vunpack.c.h.b16 %v106
    %v248 = vunpack.c.l.b16 %v107
    %v249 = vunpack.c.h.b16 %v107
    %v250 = vunpack.c.l.b16 %v108
    %v251 = vunpack.c.h.b16 %v108
    %v252 = vunpack.c.l.b16 %v109
    %v253 = vunpack.c.h.b16 %v109
    %v254 = vunpack.c.l.b16 %v110
    %v255 = vunpack.c.h.b16 %v110
    %v256 = vunpack.c.l.b16 %v111
    %v257 = vunpack.c.h.b16 %v111
    %v258 = vunpack.c.l.b16 %v112
    %v259 = vunpack.c.h.b16 %v112
    %v260 = vunpack.c.l.b16 %v113
    %v261 = vunpack.c.h.b16 %v113
    %v262 = vunpack.c.l.b16 %v114
    %v263 = vunpack.c.h.b16 %v114
    %v264 = vunpack.c.l.b16 %v115
    %v265 = vunpack.c.h.b16 %v115
    %v266 = vunpack.c.l.b16 %v116
    %v267 = vunpack.c.h.b16 %v116
    %v268 = vunpack.c.l.b16 %v117
    %v269 = vunpack.c.h.b16 %v117
    %v270 = vunpack.c.l.b16 %v118
    %v271 = vunpack.c.h.b16 %v118
    %v272 = vunpack.c.l.b16 %v119
    %v273 = vunpack.c.h.b16 %v119
    %v274 = vunpack.c.l.b16 %v120
    %v275 = vunpack.c.h.b16 %v120
    %v276 = vunpack.c.l.b16 %v121
    %v277 = vunpack.c.h.b16 %v121
    %v278 = vunpack.c.l.b16 %v122
    %v279 = vunpack.c.h.b16 %v122
    %v280 = vunpack.c.l.b16 %v123
    %v281 = vunpack.c.h.b16 %v123
    %v282 = vunpack.c.l.b16 %v124
    %v283 = vunpack.c.h.b16 %v124
    %v284 = vunpack.c.l.b16 %v125
    %v285 = vunpack.c.h.b16 %v125
    %v286 = vunpack.c.l.b16 %v126
    %v287 = vunpack.c.h.b16 %v126
    %v288 = vunpack.c.l.b16 %v127
    %v289 = vunpack.c.h.b16 %v127
    %v290 = vunpack.c.l.b16 %v128
    %v291 = vunpack.c.h.b16 %v128
    %v292 = vunpack.c.l.b16 %v129
    %v293 = vunpack.c.h.b16 %v129
    %v294 = vunpack.c.l.b16 %v130
    %v295 = vunpack.c.h.b16 %v130
    %v296 = vunpack.c.l.b16 %v131
    %v297 = vunpack.c.h.b16 %v131
    %v298 = vpack.c.b16 %v238, %v234
    %v299 = vpack.c.b16 %v239, %v235
    %v300 = vpack.c.b16 %v240, %v236
    %v301 = vpack.c.b16 %v241, %v237
    %v302 = vpack.c.b16 %v246, %v242
    %v303 = vpack.c.b16 %v247, %v243
    %v304 = vpack.c.b16 %v248, %v244
    %v305 = vpack.c.b16 %v249, %v245
    %v306 = vpack.c.b16 %v254, %v250
    %v307 = vpack.c.b16 %v255, %v251
    %v308 = vpack.c.b16 %v256, %v252
    %v309 = vpack.c.b16 %v257, %v253
    %v310 = vpack.c.b16 %v262, %v258
    %v311 = vpack.c.b16 %v263, %v259
    %v312 = vpack.c.b16 %v264, %v260
    %v313 = vpack.c.b16 %v265, %v261
    %v314 = vpack.c.b16 %v270, %v266
    %v315 = vpack.c.b16 %v271, %v267
    %v316 = vpack.c.b16 %v272, %v268
    %v317 = vpack.c.b16 %v273, %v269
    %v318 = vpack.c.b16 %v278, %v274
    %v319 = vpack.c.b16 %v279, %v275
    %v320 = vpack.c.b16 %v280, %v276
    %v321 = vpack.c.b16 %v281, %v277
    %v322 = vpack.c.b16 %v286, %v282
    %v323 = vpack.c.b16 %v287, %v283
    %v324 = vpack.c.b16 %v288, %v284
    %v325 = vpack.c.b16 %v289, %v285
    %v326 = vpack.c.b16 %v294, %v290
    %v327 = vpack.c.b16 %v295, %v291
    %v328 = vpack.c.b16 %v296, %v292
    %v329 = vpack.c.b16 %v297, %v293
    %362 = vmatprep.subr.bf16.mxu0 %v299
    %363 = vmatpush1.bf16.msra.mxu0 %v298
    %364 = vmatprep.subr.bf16.mxu0 %v303
    %365 = vmatpush1.bf16.msra.mxu0 %v302
    %366 = vmatprep.subr.bf16.mxu0 %v307
    %367 = vmatpush1.bf16.msra.mxu0 %v306
    %368 = vmatprep.subr.bf16.mxu0 %v311
    %369 = vmatpush1.bf16.msra.mxu0 %v310
    %370 = vmatprep.subr.bf16.mxu0 %v315
    %371 = vmatpush1.bf16.msra.mxu0 %v314
    %372 = vmatprep.subr.bf16.mxu0 %v319
    %373 = vmatpush1.bf16.msra.mxu0 %v318
    %374 = vmatprep.subr.bf16.mxu0 %v323
    %375 = vmatpush1.bf16.msra.mxu0 %v322
    %376 = vmatprep.subr.bf16.mxu0 %v327
    %377 = vmatpush1.bf16.msra.mxu0 %v326
    %378 = vmatprep.subr.bf16.mxu0 0
    %379 = vmatpush1.bf16.msra.mxu0 0
    %380 = vmatprep.subr.bf16.mxu0 0
    %381 = vmatpush1.bf16.msra.mxu0 0
    %382 = vmatprep.subr.bf16.mxu0 0
    %383 = vmatpush1.bf16.msra.mxu0 0
    %384 = vmatprep.subr.bf16.mxu0 0
    %385 = vmatpush1.bf16.msra.mxu0 0
    %386 = vmatprep.subr.bf16.mxu0 0
    %387 = vmatpush1.bf16.msra.mxu0 0
    %388 = vmatprep.subr.bf16.mxu0 0
    %389 = vmatpush1.bf16.msra.mxu0 0
    %390 = vmatprep.subr.bf16.mxu0 0
    %391 = vmatpush1.bf16.msra.mxu0 0
    %392 = vmatprep.subr.bf16.mxu0 0
    %393 = vmatpush1.bf16.msra.mxu0 0
    %394 = vmatprep.mubr.bf16.mxu0 0
    %395 = vmatmul.mubr.bf16.gmra.mrb[0].mxu0 %v186
    %v396 = vpop.f32.mrb[0].mxu0
    %v397 = vadd.f32 %v137, %v396
    %v398 = vpop.f32.mrb[0].mxu0
    %v399 = vadd.f32 %v141, %v398
    %v400 = vpop.f32.mrb[0].mxu0
    %v401 = vadd.f32 %v137, %v400
    %v402 = vpop.f32.mrb[0].mxu0
    %v403 = vadd.f32 %v141, %v402
    %404 = vmatprep.mubr.bf16.mxu0 0
    %405 = vmatmul.mubr.bf16.gmra.mrb[0].mxu0 %v187
    %v406 = vpop.f32.mrb[0].mxu0
    %v407 = vadd.f32 %v137, %v406
    %v408 = vpop.f32.mrb[0].mxu0
    %v409 = vadd.f32 %v141, %v408
    %v410 = vpop.f32.mrb[0].mxu0
    %v411 = vadd.f32 %v137, %v410
    %v412 = vpop.f32.mrb[0].mxu0
    %v413 = vadd.f32 %v141, %v412
    %414 = vmatprep.mubr.bf16.mxu0 0
    %415 = vmatmul.mubr.bf16.gmra.mrb[0].mxu0 %v188
    %v416 = vpop.f32.mrb[0].mxu0
    %v417 = vadd.f32 %v137, %v416
    %v418 = vpop.f32.mrb[0].mxu0
    %v419 = vadd.f32 %v141, %v418
    %v420 = vpop.f32.mrb[0].mxu0
    %v421 = vadd.f32 %v137, %v420
    %v422 = vpop.f32.mrb[0].mxu0
    %v423 = vadd.f32 %v141, %v422
    %424 = vmatprep.mubr.bf16.mxu0 0
    %425 = vmatmul.mubr.bf16.gmra.mrb[0].mxu0 %v189
    %v426 = vpop.f32.mrb[0].mxu0
    %v427 = vadd.f32 %v137, %v426
    %v428 = vpop.f32.mrb[0].mxu0
    %v429 = vadd.f32 %v141, %v428
    %v430 = vpop.f32.mrb[0].mxu0
    %v431 = vadd.f32 %v137, %v430
    %v432 = vpop.f32.mrb[0].mxu0
    %v433 = vadd.f32 %v141, %v432
    %434 = vmatprep.mubr.bf16.mxu0 0
    %435 = vmatmul.mubr.bf16.gmra.mrb[0].mxu0 %v190
    %v436 = vpop.f32.mrb[0].mxu0
    %v437 = vadd.f32 %v137, %v436
    %v438 = vpop.f32.mrb[0].mxu0
    %v439 = vadd.f32 %v141, %v438
    %v440 = vpop.f32.mrb[0].mxu0
    %v441 = vadd.f32 %v137, %v440
    %v442 = vpop.f32.mrb[0].mxu0
    %v443 = vadd.f32 %v141, %v442
    %444 = vmatprep.mubr.bf16.mxu0 0
    %445 = vmatmul.mubr.bf16.gmra.mrb[0].mxu0 %v191
    %v446 = vpop.f32.mrb[0].mxu0
    %v447 = vadd.f32 %v137, %v446
    %v448 = vpop.f32.mrb[0].mxu0
    %v449 = vadd.f32 %v141, %v448
    %v450 = vpop.f32.mrb[0].mxu0
    %v451 = vadd.f32 %v137, %v450
    %v452 = vpop.f32.mrb[0].mxu0
    %v453 = vadd.f32 %v141, %v452
    %454 = vmatprep.mubr.bf16.mxu0 0
    %455 = vmatmul.mubr.bf16.gmra.mrb[0].mxu0 %v192
    %v456 = vpop.f32.mrb[0].mxu0
    %v457 = vadd.f32 %v137, %v456
    %v458 = vpop.f32.mrb[0].mxu0
    %v459 = vadd.f32 %v141, %v458
    %v460 = vpop.f32.mrb[0].mxu0
    %v461 = vadd.f32 %v137, %v460
    %v462 = vpop.f32.mrb[0].mxu0
    %v463 = vadd.f32 %v141, %v462
    %464 = vmatprep.mubr.bf16.mxu0 0
    %465 = vmatmul.mubr.bf16.gmra.mrb[0].mxu0 %v193
    %v466 = vpop.f32.mrb[0].mxu0
    %v467 = vadd.f32 %v137, %v466
    %v468 = vpop.f32.mrb[0].mxu0
    %v469 = vadd.f32 %v141, %v468
    %v470 = vpop.f32.mrb[0].mxu0
    %v471 = vadd.f32 %v137, %v470
    %v472 = vpop.f32.mrb[0].mxu0
    %v473 = vadd.f32 %v141, %v472
    %474 = vdwg.mxu0
    %475 = vmatprep.subr.bf16.mxu0 %v301
    %476 = vmatpush1.bf16.msra.mxu0 %v300
    %477 = vmatprep.subr.bf16.mxu0 %v305
    %478 = vmatpush1.bf16.msra.mxu0 %v304
    %479 = vmatprep.subr.bf16.mxu0 %v309
    %480 = vmatpush1.bf16.msra.mxu0 %v308
    %481 = vmatprep.subr.bf16.mxu0 %v313
    %482 = vmatpush1.bf16.msra.mxu0 %v312
    %483 = vmatprep.subr.bf16.mxu0 %v317
    %484 = vmatpush1.bf16.msra.mxu0 %v316
    %485 = vmatprep.subr.bf16.mxu0 %v321
    %486 = vmatpush1.bf16.msra.mxu0 %v320
    %487 = vmatprep.subr.bf16.mxu0 %v325
    %488 = vmatpush1.bf16.msra.mxu0 %v324
    %489 = vmatprep.subr.bf16.mxu0 %v329
    %490 = vmatpush1.bf16.msra.mxu0 %v328
    %491 = vmatprep.subr.bf16.mxu0 0
    %492 = vmatpush1.bf16.msra.mxu0 0
    %493 = vmatprep.subr.bf16.mxu0 0
    %494 = vmatpush1.bf16.msra.mxu0 0
    %495 = vmatprep.subr.bf16.mxu0 0
    %496 = vmatpush1.bf16.msra.mxu0 0
    %497 = vmatprep.subr.bf16.mxu0 0
    %498 = vmatpush1.bf16.msra.mxu0 0
    %499 = vmatprep.subr.bf16.mxu0 0
    %500 = vmatpush1.bf16.msra.mxu0 0
    %501 = vmatprep.subr.bf16.mxu0 0
    %502 = vmatpush1.bf16.msra.mxu0 0
    %503 = vmatprep.subr.bf16.mxu0 0
    %504 = vmatpush1.bf16.msra.mxu0 0
    %505 = vmatprep.subr.bf16.mxu0 0
    %506 = vmatpush1.bf16.msra.mxu0 0
    %507 = vmatprep.mubr.bf16.mxu0 0
    %508 = vmatmul.mubr.bf16.gmra.mrb[0].mxu0 %v186
    %v509 = vpop.f32.mrb[0].mxu0
    %v510 = vadd.f32 %v145, %v509
    %v511 = vpop.f32.mrb[0].mxu0
    %v512 = vadd.f32 %v149, %v511
    %v513 = vpop.f32.mrb[0].mxu0
    %v514 = vadd.f32 %v145, %v513
    %v515 = vpop.f32.mrb[0].mxu0
    %v516 = vadd.f32 %v149, %v515
    %517 = vmatprep.mubr.bf16.mxu0 0
    %518 = vmatmul.mubr.bf16.gmra.mrb[0].mxu0 %v187
    %v519 = vpop.f32.mrb[0].mxu0
    %v520 = vadd.f32 %v145, %v519
    %v521 = vpop.f32.mrb[0].mxu0
    %v522 = vadd.f32 %v149, %v521
    %v523 = vpop.f32.mrb[0].mxu0
    %v524 = vadd.f32 %v145, %v523
    %v525 = vpop.f32.mrb[0].mxu0
    %v526 = vadd.f32 %v149, %v525
    %527 = vmatprep.mubr.bf16.mxu0 0
    %528 = vmatmul.mubr.bf16.gmra.mrb[0].mxu0 %v188
    %v529 = vpop.f32.mrb[0].mxu0
    %v530 = vadd.f32 %v145, %v529
    %v531 = vpop.f32.mrb[0].mxu0
    %v532 = vadd.f32 %v149, %v531
    %v533 = vpop.f32.mrb[0].mxu0
    %v534 = vadd.f32 %v145, %v533
    %v535 = vpop.f32.mrb[0].mxu0
    %v536 = vadd.f32 %v149, %v535
    %537 = vmatprep.mubr.bf16.mxu0 0
    %538 = vmatmul.mubr.bf16.gmra.mrb[0].mxu0 %v189
    %v539 = vpop.f32.mrb[0].mxu0
    %v540 = vadd.f32 %v145, %v539
    %v541 = vpop.f32.mrb[0].mxu0
    %v542 = vadd.f32 %v149, %v541
    %v543 = vpop.f32.mrb[0].mxu0
    %v544 = vadd.f32 %v145, %v543
    %v545 = vpop.f32.mrb[0].mxu0
    %v546 = vadd.f32 %v149, %v545
    %547 = vmatprep.mubr.bf16.mxu0 0
    %548 = vmatmul.mubr.bf16.gmra.mrb[0].mxu0 %v190
    %v549 = vpop.f32.mrb[0].mxu0
    %v550 = vadd.f32 %v145, %v549
    %v551 = vpop.f32.mrb[0].mxu0
    %v552 = vadd.f32 %v149, %v551
    %v553 = vpop.f32.mrb[0].mxu0
    %v554 = vadd.f32 %v145, %v553
    %v555 = vpop.f32.mrb[0].mxu0
    %v556 = vadd.f32 %v149, %v555
    %557 = vmatprep.mubr.bf16.mxu0 0
    %558 = vmatmul.mubr.bf16.gmra.mrb[0].mxu0 %v191
    %v559 = vpop.f32.mrb[0].mxu0
    %v560 = vadd.f32 %v145, %v559
    %v561 = vpop.f32.mrb[0].mxu0
    %v562 = vadd.f32 %v149, %v561
    %v563 = vpop.f32.mrb[0].mxu0
    %v564 = vadd.f32 %v145, %v563
    %v565 = vpop.f32.mrb[0].mxu0
    %v566 = vadd.f32 %v149, %v565
    %567 = vmatprep.mubr.bf16.mxu0 0
    %568 = vmatmul.mubr.bf16.gmra.mrb[0].mxu0 %v192
    %v569 = vpop.f32.mrb[0].mxu0
    %v570 = vadd.f32 %v145, %v569
    %v571 = vpop.f32.mrb[0].mxu0
    %v572 = vadd.f32 %v149, %v571
    %v573 = vpop.f32.mrb[0].mxu0
    %v574 = vadd.f32 %v145, %v573
    %v575 = vpop.f32.mrb[0].mxu0
    %v576 = vadd.f32 %v149, %v575
    %577 = vmatprep.mubr.bf16.mxu0 0
    %578 = vmatmul.mubr.bf16.gmra.mrb[0].mxu0 %v193
    %v579 = vpop.f32.mrb[0].mxu0
    %v580 = vadd.f32 %v145, %v579
    %v581 = vpop.f32.mrb[0].mxu0
    %v582 = vadd.f32 %v149, %v581
    %v583 = vpop.f32.mrb[0].mxu0
    %v584 = vadd.f32 %v145, %v583
    %v585 = vpop.f32.mrb[0].mxu0
    %v586 = vadd.f32 %v149, %v585
    %587 = vdwg.mxu0
    %v588 = vpack.c.bf16 %v401, %v397
    %v589 = vpack.c.bf16 %v403, %v399
    %v590 = vpack.c.bf16 %v514, %v510
    %v591 = vpack.c.bf16 %v516, %v512
    %v592 = vpack.c.bf16 %v411, %v407
    %v593 = vpack.c.bf16 %v413, %v409
    %v594 = vpack.c.bf16 %v524, %v520
    %v595 = vpack.c.bf16 %v526, %v522
    %v596 = vpack.c.bf16 %v421, %v417
    %v597 = vpack.c.bf16 %v423, %v419
    %v598 = vpack.c.bf16 %v534, %v530
    %v599 = vpack.c.bf16 %v536, %v532
    %v600 = vpack.c.bf16 %v431, %v427
    %v601 = vpack.c.bf16 %v433, %v429
    %v602 = vpack.c.bf16 %v544, %v540
    %v603 = vpack.c.bf16 %v546, %v542
    %v604 = vpack.c.bf16 %v441, %v437
    %v605 = vpack.c.bf16 %v443, %v439
    %v606 = vpack.c.bf16 %v554, %v550
    %v607 = vpack.c.bf16 %v556, %v552
    %v608 = vpack.c.bf16 %v451, %v447
    %v609 = vpack.c.bf16 %v453, %v449
    %v610 = vpack.c.bf16 %v564, %v560
    %v611 = vpack.c.bf16 %v566, %v562
    %v612 = vpack.c.bf16 %v461, %v457
    %v613 = vpack.c.bf16 %v463, %v459
    %v614 = vpack.c.bf16 %v574, %v570
    %v615 = vpack.c.bf16 %v576, %v572
    %v616 = vpack.c.bf16 %v471, %v467
    %v617 = vpack.c.bf16 %v473, %v469
    %v618 = vpack.c.bf16 %v584, %v580
    %v619 = vpack.c.bf16 %v586, %v582
    %620 = vst [vmem:[#allocation2] sm:$0xff] %v588
    %621 = vst [vmem:[#allocation2 + $0x8] sm:$0xff] %v589
    %622 = vst [vmem:[#allocation2 + $0x10] sm:$0xff] %v590
    %623 = vst [vmem:[#allocation2 + $0x18] sm:$0xff] %v591
    %s624 = scalar_lea.vmem [#allocation2], 32
    %625 = vst [vmem:[%s624] sm:$0xff] %v592
    %626 = vst [vmem:[%s624 + $0x8] sm:$0xff] %v593
    %627 = vst [vmem:[%s624 + $0x10] sm:$0xff] %v594
    %628 = vst [vmem:[%s624 + $0x18] sm:$0xff] %v595
    %s629 = scalar_lea.vmem [#allocation2], 64
    %630 = vst [vmem:[%s629] sm:$0xff] %v596
    %631 = vst [vmem:[%s629 + $0x8] sm:$0xff] %v597
    %632 = vst [vmem:[%s629 + $0x10] sm:$0xff] %v598
    %633 = vst [vmem:[%s629 + $0x18] sm:$0xff] %v599
    %s634 = scalar_lea.vmem [#allocation2], 96
    %635 = vst [vmem:[%s634] sm:$0xff] %v600
    %636 = vst [vmem:[%s634 + $0x8] sm:$0xff] %v601
    %637 = vst [vmem:[%s634 + $0x10] sm:$0xff] %v602
    %638 = vst [vmem:[%s634 + $0x18] sm:$0xff] %v603
    %s639 = scalar_lea.vmem [#allocation2], 128
    %640 = vst [vmem:[%s639] sm:$0xff] %v604
    %641 = vst [vmem:[%s639 + $0x8] sm:$0xff] %v605
    %642 = vst [vmem:[%s639 + $0x10] sm:$0xff] %v606
    %643 = vst [vmem:[%s639 + $0x18] sm:$0xff] %v607
    %s644 = scalar_lea.vmem [#allocation2], 160
    %645 = vst [vmem:[%s644] sm:$0xff] %v608
    %646 = vst [vmem:[%s644 + $0x8] sm:$0xff] %v609
    %647 = vst [vmem:[%s644 + $0x10] sm:$0xff] %v610
    %648 = vst [vmem:[%s644 + $0x18] sm:$0xff] %v611
    %s649 = scalar_lea.vmem [#allocation2], 192
    %650 = vst [vmem:[%s649] sm:$0xff] %v612
    %651 = vst [vmem:[%s649 + $0x8] sm:$0xff] %v613
    %652 = vst [vmem:[%s649 + $0x10] sm:$0xff] %v614
    %653 = vst [vmem:[%s649 + $0x18] sm:$0xff] %v615
    %s654 = scalar_lea.vmem [#allocation2], 224
    %655 = vst [vmem:[%s654] sm:$0xff] %v616
    %656 = vst [vmem:[%s654 + $0x8] sm:$0xff] %v617
    %657 = vst [vmem:[%s654 + $0x10] sm:$0xff] %v618
    %658 = vst [vmem:[%s654 + $0x18] sm:$0xff] %v619
    %v659 = vld [vmem:[#allocation8] sm:$0xff]
    %v660 = vld [vmem:[#allocation8 + $0x8] sm:$0xff]
    %v661 = vld [vmem:[#allocation8 + $0x10] sm:$0xff]
    %v662 = vld [vmem:[#allocation8 + $0x18] sm:$0xff]
    %v663 = vld [vmem:[#allocation8 + $0x20] sm:$0xff]
    %v664 = vld [vmem:[#allocation8 + $0x28] sm:$0xff]
    %v665 = vld [vmem:[#allocation8 + $0x30] sm:$0xff]
    %v666 = vld [vmem:[#allocation8 + $0x38] sm:$0xff]
    %v667 = vld [vmem:[#allocation8 + $0x40] sm:$0xff]
    %v668 = vld [vmem:[#allocation8 + $0x48] sm:$0xff]
    %v669 = vld [vmem:[#allocation8 + $0x50] sm:$0xff]
    %v670 = vld [vmem:[#allocation8 + $0x58] sm:$0xff]
    %v671 = vld [vmem:[#allocation8 + $0x60] sm:$0xff]
    %v672 = vld [vmem:[#allocation8 + $0x68] sm:$0xff]
    %v673 = vld [vmem:[#allocation8 + $0x70] sm:$0xff]
    %v674 = vld [vmem:[#allocation8 + $0x78] sm:$0xff]
    %v675 = vld [vmem:[#allocation8 + $0x80] sm:$0xff]
    %v676 = vld [vmem:[#allocation8 + $0x88] sm:$0xff]
    %v677 = vld [vmem:[#allocation8 + $0x90] sm:$0xff]
    %v678 = vld [vmem:[#allocation8 + $0x98] sm:$0xff]
    %v679 = vld [vmem:[#allocation8 + $0xa0] sm:$0xff]
    %v680 = vld [vmem:[#allocation8 + $0xa8] sm:$0xff]
    %v681 = vld [vmem:[#allocation8 + $0xb0] sm:$0xff]
    %v682 = vld [vmem:[#allocation8 + $0xb8] sm:$0xff]
    %v683 = vld [vmem:[#allocation8 + $0xc0] sm:$0xff]
    %v684 = vld [vmem:[#allocation8 + $0xc8] sm:$0xff]
    %v685 = vld [vmem:[#allocation8 + $0xd0] sm:$0xff]
    %v686 = vld [vmem:[#allocation8 + $0xd8] sm:$0xff]
    %v687 = vld [vmem:[#allocation8 + $0xe0] sm:$0xff]
    %v688 = vld [vmem:[#allocation8 + $0xe8] sm:$0xff]
    %v689 = vld [vmem:[#allocation8 + $0xf0] sm:$0xff]
    %v690 = vld [vmem:[#allocation8 + $0xf8] sm:$0xff]
    %v691 = vld [vmem:[#allocation2] sm:$0xff]
    %v692 = vld [vmem:[#allocation2 + $0x8] sm:$0xff]
    %v693 = vld [vmem:[#allocation2 + $0x10] sm:$0xff]
    %v694 = vld [vmem:[#allocation2 + $0x18] sm:$0xff]
    %v695 = vunpack.c.l.bf16 %v691
    %v696 = vunpack.c.l.bf16 %v692
    %v697 = vunpack.c.l.bf16 %v693
    %v698 = vunpack.c.l.bf16 %v694
    %v699 = vunpack.c.h.bf16 %v691
    %v700 = vunpack.c.h.bf16 %v692
    %v701 = vunpack.c.h.bf16 %v693
    %v702 = vunpack.c.h.bf16 %v694
    %v735 = vunpack.c.l.b16 %v659
    %v736 = vunpack.c.h.b16 %v659
    %v737 = vunpack.c.l.b16 %v660
    %v738 = vunpack.c.h.b16 %v660
    %v739 = vunpack.c.l.b16 %v661
    %v740 = vunpack.c.h.b16 %v661
    %v741 = vunpack.c.l.b16 %v662
    %v742 = vunpack.c.h.b16 %v662
    %v743 = vunpack.c.l.b16 %v663
    %v744 = vunpack.c.h.b16 %v663
    %v745 = vunpack.c.l.b16 %v664
    %v746 = vunpack.c.h.b16 %v664
    %v747 = vunpack.c.l.b16 %v665
    %v748 = vunpack.c.h.b16 %v665
    %v749 = vunpack.c.l.b16 %v666
    %v750 = vunpack.c.h.b16 %v666
    %v751 = vunpack.c.l.b16 %v667
    %v752 = vunpack.c.h.b16 %v667
    %v753 = vunpack.c.l.b16 %v668
    %v754 = vunpack.c.h.b16 %v668
    %v755 = vunpack.c.l.b16 %v669
    %v756 = vunpack.c.h.b16 %v669
    %v757 = vunpack.c.l.b16 %v670
    %v758 = vunpack.c.h.b16 %v670
    %v759 = vunpack.c.l.b16 %v671
    %v760 = vunpack.c.h.b16 %v671
    %v761 = vunpack.c.l.b16 %v672
    %v762 = vunpack.c.h.b16 %v672
    %v763 = vunpack.c.l.b16 %v673
    %v764 = vunpack.c.h.b16 %v673
    %v765 = vunpack.c.l.b16 %v674
    %v766 = vunpack.c.h.b16 %v674
    %v767 = vunpack.c.l.b16 %v675
    %v768 = vunpack.c.h.b16 %v675
    %v769 = vunpack.c.l.b16 %v676
    %v770 = vunpack.c.h.b16 %v676
    %v771 = vunpack.c.l.b16 %v677
    %v772 = vunpack.c.h.b16 %v677
    %v773 = vunpack.c.l.b16 %v678
    %v774 = vunpack.c.h.b16 %v678
    %v775 = vunpack.c.l.b16 %v679
    %v776 = vunpack.c.h.b16 %v679
    %v777 = vunpack.c.l.b16 %v680
    %v778 = vunpack.c.h.b16 %v680
    %v779 = vunpack.c.l.b16 %v681
    %v780 = vunpack.c.h.b16 %v681
    %v781 = vunpack.c.l.b16 %v682
    %v782 = vunpack.c.h.b16 %v682
    %v783 = vunpack.c.l.b16 %v683
    %v784 = vunpack.c.h.b16 %v683
    %v785 = vunpack.c.l.b16 %v684
    %v786 = vunpack.c.h.b16 %v684
    %v787 = vunpack.c.l.b16 %v685
    %v788 = vunpack.c.h.b16 %v685
    %v789 = vunpack.c.l.b16 %v686
    %v790 = vunpack.c.h.b16 %v686
    %v791 = vunpack.c.l.b16 %v687
    %v792 = vunpack.c.h.b16 %v687
    %v793 = vunpack.c.l.b16 %v688
    %v794 = vunpack.c.h.b16 %v688
    %v795 = vunpack.c.l.b16 %v689
    %v796 = vunpack.c.h.b16 %v689
    %v797 = vunpack.c.l.b16 %v690
    %v798 = vunpack.c.h.b16 %v690
    %v799 = vpack.c.b16 %v739, %v735
    %v800 = vpack.c.b16 %v740, %v736
    %v801 = vpack.c.b16 %v741, %v737
    %v802 = vpack.c.b16 %v742, %v738
    %v803 = vpack.c.b16 %v747, %v743
    %v804 = vpack.c.b16 %v748, %v744
    %v805 = vpack.c.b16 %v749, %v745
    %v806 = vpack.c.b16 %v750, %v746
    %v807 = vpack.c.b16 %v755, %v751
    %v808 = vpack.c.b16 %v756, %v752
    %v809 = vpack.c.b16 %v757, %v753
    %v810 = vpack.c.b16 %v758, %v754
    %v811 = vpack.c.b16 %v763, %v759
    %v812 = vpack.c.b16 %v764, %v760
    %v813 = vpack.c.b16 %v765, %v761
    %v814 = vpack.c.b16 %v766, %v762
    %v815 = vpack.c.b16 %v771, %v767
    %v816 = vpack.c.b16 %v772, %v768
    %v817 = vpack.c.b16 %v773, %v769
    %v818 = vpack.c.b16 %v774, %v770
    %v819 = vpack.c.b16 %v779, %v775
    %v820 = vpack.c.b16 %v780, %v776
    %v821 = vpack.c.b16 %v781, %v777
    %v822 = vpack.c.b16 %v782, %v778
    %v823 = vpack.c.b16 %v787, %v783
    %v824 = vpack.c.b16 %v788, %v784
    %v825 = vpack.c.b16 %v789, %v785
    %v826 = vpack.c.b16 %v790, %v786
    %v827 = vpack.c.b16 %v795, %v791
    %v828 = vpack.c.b16 %v796, %v792
    %v829 = vpack.c.b16 %v797, %v793
    %v830 = vpack.c.b16 %v798, %v794
    %863 = vmatprep.subr.bf16.mxu0 %v800
    %864 = vmatpush1.bf16.msra.mxu0 %v799
    %865 = vmatprep.subr.bf16.mxu0 %v804
    %866 = vmatpush1.bf16.msra.mxu0 %v803
    %867 = vmatprep.subr.bf16.mxu0 %v808
    %868 = vmatpush1.bf16.msra.mxu0 %v807
    %869 = vmatprep.subr.bf16.mxu0 %v812
    %870 = vmatpush1.bf16.msra.mxu0 %v811
    %871 = vmatprep.subr.bf16.mxu0 %v816
    %872 = vmatpush1.bf16.msra.mxu0 %v815
    %873 = vmatprep.subr.bf16.mxu0 %v820
    %874 = vmatpush1.bf16.msra.mxu0 %v819
    %875 = vmatprep.subr.bf16.mxu0 %v824
    %876 = vmatpush1.bf16.msra.mxu0 %v823
    %877 = vmatprep.subr.bf16.mxu0 %v828
    %878 = vmatpush1.bf16.msra.mxu0 %v827
    %879 = vmatprep.subr.bf16.mxu0 0
    %880 = vmatpush1.bf16.msra.mxu0 0
    %881 = vmatprep.subr.bf16.mxu0 0
    %882 = vmatpush1.bf16.msra.mxu0 0
    %883 = vmatprep.subr.bf16.mxu0 0
    %884 = vmatpush1.bf16.msra.mxu0 0
    %885 = vmatprep.subr.bf16.mxu0 0
    %886 = vmatpush1.bf16.msra.mxu0 0
    %887 = vmatprep.subr.bf16.mxu0 0
    %888 = vmatpush1.bf16.msra.mxu0 0
    %889 = vmatprep.subr.bf16.mxu0 0
    %890 = vmatpush1.bf16.msra.mxu0 0
    %891 = vmatprep.subr.bf16.mxu0 0
    %892 = vmatpush1.bf16.msra.mxu0 0
    %893 = vmatprep.subr.bf16.mxu0 0
    %894 = vmatpush1.bf16.msra.mxu0 0
    %895 = vmatprep.mubr.bf16.mxu0 0
    %896 = vmatmul.mubr.bf16.gmra.mrb[0].mxu0 0
    %v897 = vpop.f32.mrb[0].mxu0
    %v898 = vadd.f32 0.0, %v897
    %v899 = vpop.f32.mrb[0].mxu0
    %v900 = vadd.f32 0.0, %v899
    %v901 = vpop.f32.mrb[0].mxu0
    %v902 = vadd.f32 0.0, %v901
    %v903 = vpop.f32.mrb[0].mxu0
    %v904 = vadd.f32 0.0, %v903
    %905 = vdwg.mxu0
    %906 = vmatprep.subr.bf16.mxu0 %v802
    %907 = vmatpush1.bf16.msra.mxu0 %v801
    %908 = vmatprep.subr.bf16.mxu0 %v806
    %909 = vmatpush1.bf16.msra.mxu0 %v805
    %910 = vmatprep.subr.bf16.mxu0 %v810
    %911 = vmatpush1.bf16.msra.mxu0 %v809
    %912 = vmatprep.subr.bf16.mxu0 %v814
    %913 = vmatpush1.bf16.msra.mxu0 %v813
    %914 = vmatprep.subr.bf16.mxu0 %v818
    %915 = vmatpush1.bf16.msra.mxu0 %v817
    %916 = vmatprep.subr.bf16.mxu0 %v822
    %917 = vmatpush1.bf16.msra.mxu0 %v821
    %918 = vmatprep.subr.bf16.mxu0 %v826
    %919 = vmatpush1.bf16.msra.mxu0 %v825
    %920 = vmatprep.subr.bf16.mxu0 %v830
    %921 = vmatpush1.bf16.msra.mxu0 %v829
    %922 = vmatprep.subr.bf16.mxu0 0
    %923 = vmatpush1.bf16.msra.mxu0 0
    %924 = vmatprep.subr.bf16.mxu0 0
    %925 = vmatpush1.bf16.msra.mxu0 0
    %926 = vmatprep.subr.bf16.mxu0 0
    %927 = vmatpush1.bf16.msra.mxu0 0
    %928 = vmatprep.subr.bf16.mxu0 0
    %929 = vmatpush1.bf16.msra.mxu0 0
    %930 = vmatprep.subr.bf16.mxu0 0
    %931 = vmatpush1.bf16.msra.mxu0 0
    %932 = vmatprep.subr.bf16.mxu0 0
    %933 = vmatpush1.bf16.msra.mxu0 0
    %934 = vmatprep.subr.bf16.mxu0 0
    %935 = vmatpush1.bf16.msra.mxu0 0
    %936 = vmatprep.subr.bf16.mxu0 0
    %937 = vmatpush1.bf16.msra.mxu0 0
    %938 = vmatprep.mubr.bf16.mxu0 0
    %939 = vmatmul.mubr.bf16.gmra.mrb[0].mxu0 0
    %v940 = vpop.f32.mrb[0].mxu0
    %v941 = vadd.f32 0.0, %v940
    %v942 = vpop.f32.mrb[0].mxu0
    %v943 = vadd.f32 0.0, %v942
    %v944 = vpop.f32.mrb[0].mxu0
    %v945 = vadd.f32 0.0, %v944
    %v946 = vpop.f32.mrb[0].mxu0
    %v947 = vadd.f32 0.0, %v946
    %948 = vdwg.mxu0
    %v949 = vadd.f32 %v695, %v898
    %v950 = vadd.f32 %v696, %v900
    %v951 = vadd.f32 %v697, %v941
    %v952 = vadd.f32 %v698, %v943
    %v953 = vadd.f32 %v699, %v902
    %v954 = vadd.f32 %v700, %v904
    %v955 = vadd.f32 %v701, %v945
    %v956 = vadd.f32 %v702, %v947
    %v957 = vxor.u32 %v949, 2147483648
    %v958 = vxor.u32 %v953, 2147483648
    %v959 = vmul.f32 %v957, 1.442695
    %v960 = vpow.pop %v959
    %v961 = vmul.f32 %v958, 1.442695
    %v962 = vpow.pop %v961
    %v963 = vadd.f32 %v960, 1.0
    %v964 = vadd.f32 %v962, 1.0
    %v965 = vrcp.pop %v963
    %v966 = vmul.f32 1.0, %v965
    %v967 = vrcp.pop %v964
    %v968 = vmul.f32 1.0, %v967
    %v969 = vxor.u32 %v950, 2147483648
    %v970 = vxor.u32 %v954, 2147483648
    %v971 = vmul.f32 %v969, 1.442695
    %v972 = vpow.pop %v971
    %v973 = vmul.f32 %v970, 1.442695
    %v974 = vpow.pop %v973
    %v975 = vadd.f32 %v972, 1.0
    %v976 = vadd.f32 %v974, 1.0
    %v977 = vrcp.pop %v975
    %v978 = vmul.f32 1.0, %v977
    %v979 = vrcp.pop %v976
    %v980 = vmul.f32 1.0, %v979
    %v981 = vtanh.pop %v951
    %v982 = vtanh.pop %v955
    %v983 = vxor.u32 %v952, 2147483648
    %v984 = vxor.u32 %v956, 2147483648
    %v985 = vmul.f32 %v983, 1.442695
    %v986 = vpow.pop %v985
    %v987 = vmul.f32 %v984, 1.442695
    %v988 = vpow.pop %v987
    %v989 = vadd.f32 %v986, 1.0
    %v990 = vadd.f32 %v988, 1.0
    %v991 = vrcp.pop %v989
    %v992 = vmul.f32 1.0, %v991
    %v993 = vrcp.pop %v990
    %v994 = vmul.f32 1.0, %v993
    %v995 = vmul.f32 %v978, 0.0
    %v996 = vmul.f32 %v980, 0.0
    %v997 = vmul.f32 %v966, %v981
    %v998 = vmul.f32 %v968, %v982
    %v999 = vadd.f32 %v995, %v997
    %v1000 = vadd.f32 %v996, %v998
    %v1001 = vtanh.pop %v999
    %v1002 = vtanh.pop %v1000
    %v1003 = vmul.f32 %v992, %v1001
    %v1004 = vmul.f32 %v994, %v1002
    %v1005 = vld [vmem:[%s624] sm:$0xff]
    %v1006 = vld [vmem:[%s624 + $0x8] sm:$0xff]
    %v1007 = vld [vmem:[%s624 + $0x10] sm:$0xff]
    %v1008 = vld [vmem:[%s624 + $0x18] sm:$0xff]
    %v1009 = vunpack.c.l.bf16 %v1005
    %v1010 = vunpack.c.l.bf16 %v1006
    %v1011 = vunpack.c.l.bf16 %v1007
    %v1012 = vunpack.c.l.bf16 %v1008
    %v1013 = vunpack.c.h.bf16 %v1005
    %v1014 = vunpack.c.h.bf16 %v1006
    %v1015 = vunpack.c.h.bf16 %v1007
    %v1016 = vunpack.c.h.bf16 %v1008
    %v1017 = vpack.c.bf16 %v1004, %v1003
    %1018 = vmatprep.subr.bf16.mxu0 %v800
    %1019 = vmatpush1.bf16.msra.mxu0 %v799
    %1020 = vmatprep.subr.bf16.mxu0 %v804
    %1021 = vmatpush1.bf16.msra.mxu0 %v803
    %1022 = vmatprep.subr.bf16.mxu0 %v808
    %1023 = vmatpush1.bf16.msra.mxu0 %v807
    %1024 = vmatprep.subr.bf16.mxu0 %v812
    %1025 = vmatpush1.bf16.msra.mxu0 %v811
    %1026 = vmatprep.subr.bf16.mxu0 %v816
    %1027 = vmatpush1.bf16.msra.mxu0 %v815
    %1028 = vmatprep.subr.bf16.mxu0 %v820
    %1029 = vmatpush1.bf16.msra.mxu0 %v819
    %1030 = vmatprep.subr.bf16.mxu0 %v824
    %1031 = vmatpush1.bf16.msra.mxu0 %v823
    %1032 = vmatprep.subr.bf16.mxu0 %v828
    %1033 = vmatpush1.bf16.msra.mxu0 %v827
    %1034 = vmatprep.subr.bf16.mxu0 0
    %1035 = vmatpush1.bf16.msra.mxu0 0
    %1036 = vmatprep.subr.bf16.mxu0 0
    %1037 = vmatpush1.bf16.msra.mxu0 0
    %1038 = vmatprep.subr.bf16.mxu0 0
    %1039 = vmatpush1.bf16.msra.mxu0 0
    %1040 = vmatprep.subr.bf16.mxu0 0
    %1041 = vmatpush1.bf16.msra.mxu0 0
    %1042 = vmatprep.subr.bf16.mxu0 0
    %1043 = vmatpush1.bf16.msra.mxu0 0
    %1044 = vmatprep.subr.bf16.mxu0 0
    %1045 = vmatpush1.bf16.msra.mxu0 0
    %1046 = vmatprep.subr.bf16.mxu0 0
    %1047 = vmatpush1.bf16.msra.mxu0 0
    %1048 = vmatprep.subr.bf16.mxu0 0
    %1049 = vmatpush1.bf16.msra.mxu0 0
    %1050 = vmatprep.mubr.bf16.mxu0 0
    %1051 = vmatmul.mubr.bf16.gmra.mrb[0].mxu0 %v1017
    %v1052 = vpop.f32.mrb[0].mxu0
    %v1053 = vadd.f32 0.0, %v1052
    %v1054 = vpop.f32.mrb[0].mxu0
    %v1055 = vadd.f32 0.0, %v1054
    %v1056 = vpop.f32.mrb[0].mxu0
    %v1057 = vadd.f32 0.0, %v1056
    %v1058 = vpop.f32.mrb[0].mxu0
    %v1059 = vadd.f32 0.0, %v1058
    %1060 = vdwg.mxu0
    %1061 = vmatprep.subr.bf16.mxu0 %v802
    %1062 = vmatpush1.bf16.msra.mxu0 %v801
    %1063 = vmatprep.subr.bf16.mxu0 %v806
    %1064 = vmatpush1.bf16.msra.mxu0 %v805
    %1065 = vmatprep.subr.bf16.mxu0 %v810
    %1066 = vmatpush1.bf16.msra.mxu0 %v809
    %1067 = vmatprep.subr.bf16.mxu0 %v814
    %1068 = vmatpush1.bf16.msra.mxu0 %v813
    %1069 = vmatprep.subr.bf16.mxu0 %v818
    %1070 = vmatpush1.bf16.msra.mxu0 %v817
    %1071 = vmatprep.subr.bf16.mxu0 %v822
    %1072 = vmatpush1.bf16.msra.mxu0 %v821
    %1073 = vmatprep.subr.bf16.mxu0 %v826
    %1074 = vmatpush1.bf16.msra.mxu0 %v825
    %1075 = vmatprep.subr.bf16.mxu0 %v830
    %1076 = vmatpush1.bf16.msra.mxu0 %v829
    %1077 = vmatprep.subr.bf16.mxu0 0
    %1078 = vmatpush1.bf16.msra.mxu0 0
    %1079 = vmatprep.subr.bf16.mxu0 0
    %1080 = vmatpush1.bf16.msra.mxu0 0
    %1081 = vmatprep.subr.bf16.mxu0 0
    %1082 = vmatpush1.bf16.msra.mxu0 0
    %1083 = vmatprep.subr.bf16.mxu0 0
    %1084 = vmatpush1.bf16.msra.mxu0 0
    %1085 = vmatprep.subr.bf16.mxu0 0
    %1086 = vmatpush1.bf16.msra.mxu0 0
    %1087 = vmatprep.subr.bf16.mxu0 0
    %1088 = vmatpush1.bf16.msra.mxu0 0
    %1089 = vmatprep.subr.bf16.mxu0 0
    %1090 = vmatpush1.bf16.msra.mxu0 0
    %1091 = vmatprep.subr.bf16.mxu0 0
    %1092 = vmatpush1.bf16.msra.mxu0 0
    %1093 = vmatprep.mubr.bf16.mxu0 0
    %1094 = vmatmul.mubr.bf16.gmra.mrb[0].mxu0 %v1017
    %v1095 = vpop.f32.mrb[0].mxu0
    %v1096 = vadd.f32 0.0, %v1095
    %v1097 = vpop.f32.mrb[0].mxu0
    %v1098 = vadd.f32 0.0, %v1097
    %v1099 = vpop.f32.mrb[0].mxu0
    %v1100 = vadd.f32 0.0, %v1099
    %v1101 = vpop.f32.mrb[0].mxu0
    %v1102 = vadd.f32 0.0, %v1101
    %1103 = vdwg.mxu0
    %v1104 = vadd.f32 %v1009, %v1053
    %v1105 = vadd.f32 %v1010, %v1055
    %v1106 = vadd.f32 %v1011, %v1096
    %v1107 = vadd.f32 %v1012, %v1098
    %v1108 = vadd.f32 %v1013, %v1057
    %v1109 = vadd.f32 %v1014, %v1059
    %v1110 = vadd.f32 %v1015, %v1100
    %v1111 = vadd.f32 %v1016, %v1102
    %v1112 = vxor.u32 %v1104, 2147483648
    %v1113 = vxor.u32 %v1108, 2147483648
    %v1114 = vmul.f32 %v1112, 1.442695
    %v1115 = vpow.pop %v1114
    %v1116 = vmul.f32 %v1113, 1.442695
    %v1117 = vpow.pop %v1116
    %v1118 = vadd.f32 %v1115, 1.0
    %v1119 = vadd.f32 %v1117, 1.0
    %v1120 = vrcp.pop %v1118
    %v1121 = vmul.f32 1.0, %v1120
    %v1122 = vrcp.pop %v1119
    %v1123 = vmul.f32 1.0, %v1122
    %v1124 = vxor.u32 %v1105, 2147483648
    %v1125 = vxor.u32 %v1109, 2147483648
    %v1126 = vmul.f32 %v1124, 1.442695
    %v1127 = vpow.pop %v1126
    %v1128 = vmul.f32 %v1125, 1.442695
    %v1129 = vpow.pop %v1128
    %v1130 = vadd.f32 %v1127, 1.0
    %v1131 = vadd.f32 %v1129, 1.0
    %v1132 = vrcp.pop %v1130
    %v1133 = vmul.f32 1.0, %v1132
    %v1134 = vrcp.pop %v1131
    %v1135 = vmul.f32 1.0, %v1134
    %v1136 = vtanh.pop %v1106
    %v1137 = vtanh.pop %v1110
    %v1138 = vxor.u32 %v1107, 2147483648
    %v1139 = vxor.u32 %v1111, 2147483648
    %v1140 = vmul.f32 %v1138, 1.442695
    %v1141 = vpow.pop %v1140
    %v1142 = vmul.f32 %v1139, 1.442695
    %v1143 = vpow.pop %v1142
    %v1144 = vadd.f32 %v1141, 1.0
    %v1145 = vadd.f32 %v1143, 1.0
    %v1146 = vrcp.pop %v1144
    %v1147 = vmul.f32 1.0, %v1146
    %v1148 = vrcp.pop %v1145
    %v1149 = vmul.f32 1.0, %v1148
    %v1150 = vmul.f32 %v1133, %v999
    %v1151 = vmul.f32 %v1135, %v1000
    %v1152 = vmul.f32 %v1121, %v1136
    %v1153 = vmul.f32 %v1123, %v1137
    %v1154 = vadd.f32 %v1150, %v1152
    %v1155 = vadd.f32 %v1151, %v1153
    %v1156 = vtanh.pop %v1154
    %v1157 = vtanh.pop %v1155
    %v1158 = vmul.f32 %v1147, %v1156
    %v1159 = vmul.f32 %v1149, %v1157
    %v1160 = vld [vmem:[%s629] sm:$0xff]
    %v1161 = vld [vmem:[%s629 + $0x8] sm:$0xff]
    %v1162 = vld [vmem:[%s629 + $0x10] sm:$0xff]
    %v1163 = vld [vmem:[%s629 + $0x18] sm:$0xff]
    %v1164 = vunpack.c.l.bf16 %v1160
    %v1165 = vunpack.c.l.bf16 %v1161
    %v1166 = vunpack.c.l.bf16 %v1162
    %v1167 = vunpack.c.l.bf16 %v1163
    %v1168 = vunpack.c.h.bf16 %v1160
    %v1169 = vunpack.c.h.bf16 %v1161
    %v1170 = vunpack.c.h.bf16 %v1162
    %v1171 = vunpack.c.h.bf16 %v1163
    %v1172 = vpack.c.bf16 %v1159, %v1158
    %1173 = vmatprep.subr.bf16.mxu0 %v800
    %1174 = vmatpush1.bf16.msra.mxu0 %v799
    %1175 = vmatprep.subr.bf16.mxu0 %v804
    %1176 = vmatpush1.bf16.msra.mxu0 %v803
    %1177 = vmatprep.subr.bf16.mxu0 %v808
    %1178 = vmatpush1.bf16.msra.mxu0 %v807
    %1179 = vmatprep.subr.bf16.mxu0 %v812
    %1180 = vmatpush1.bf16.msra.mxu0 %v811
    %1181 = vmatprep.subr.bf16.mxu0 %v816
    %1182 = vmatpush1.bf16.msra.mxu0 %v815
    %1183 = vmatprep.subr.bf16.mxu0 %v820
    %1184 = vmatpush1.bf16.msra.mxu0 %v819
    %1185 = vmatprep.subr.bf16.mxu0 %v824
    %1186 = vmatpush1.bf16.msra.mxu0 %v823
    %1187 = vmatprep.subr.bf16.mxu0 %v828
    %1188 = vmatpush1.bf16.msra.mxu0 %v827
    %1189 = vmatprep.subr.bf16.mxu0 0
    %1190 = vmatpush1.bf16.msra.mxu0 0
    %1191 = vmatprep.subr.bf16.mxu0 0
    %1192 = vmatpush1.bf16.msra.mxu0 0
    %1193 = vmatprep.subr.bf16.mxu0 0
    %1194 = vmatpush1.bf16.msra.mxu0 0
    %1195 = vmatprep.subr.bf16.mxu0 0
    %1196 = vmatpush1.bf16.msra.mxu0 0
    %1197 = vmatprep.subr.bf16.mxu0 0
    %1198 = vmatpush1.bf16.msra.mxu0 0
    %1199 = vmatprep.subr.bf16.mxu0 0
    %1200 = vmatpush1.bf16.msra.mxu0 0
    %1201 = vmatprep.subr.bf16.mxu0 0
    %1202 = vmatpush1.bf16.msra.mxu0 0
    %1203 = vmatprep.subr.bf16.mxu0 0
    %1204 = vmatpush1.bf16.msra.mxu0 0
    %1205 = vmatprep.mubr.bf16.mxu0 0
    %1206 = vmatmul.mubr.bf16.gmra.mrb[0].mxu0 %v1172
    %v1207 = vpop.f32.mrb[0].mxu0
    %v1208 = vadd.f32 0.0, %v1207
    %v1209 = vpop.f32.mrb[0].mxu0
    %v1210 = vadd.f32 0.0, %v1209
    %v1211 = vpop.f32.mrb[0].mxu0
    %v1212 = vadd.f32 0.0, %v1211
    %v1213 = vpop.f32.mrb[0].mxu0
    %v1214 = vadd.f32 0.0, %v1213
    %1215 = vdwg.mxu0
    %1216 = vmatprep.subr.bf16.mxu0 %v802
    %1217 = vmatpush1.bf16.msra.mxu0 %v801
    %1218 = vmatprep.subr.bf16.mxu0 %v806
    %1219 = vmatpush1.bf16.msra.mxu0 %v805
    %1220 = vmatprep.subr.bf16.mxu0 %v810
    %1221 = vmatpush1.bf16.msra.mxu0 %v809
    %1222 = vmatprep.subr.bf16.mxu0 %v814
    %1223 = vmatpush1.bf16.msra.mxu0 %v813
    %1224 = vmatprep.subr.bf16.mxu0 %v818
    %1225 = vmatpush1.bf16.msra.mxu0 %v817
    %1226 = vmatprep.subr.bf16.mxu0 %v822
    %1227 = vmatpush1.bf16.msra.mxu0 %v821
    %1228 = vmatprep.subr.bf16.mxu0 %v826
    %1229 = vmatpush1.bf16.msra.mxu0 %v825
    %1230 = vmatprep.subr.bf16.mxu0 %v830
    %1231 = vmatpush1.bf16.msra.mxu0 %v829
    %1232 = vmatprep.subr.bf16.mxu0 0
    %1233 = vmatpush1.bf16.msra.mxu0 0
    %1234 = vmatprep.subr.bf16.mxu0 0
    %1235 = vmatpush1.bf16.msra.mxu0 0
    %1236 = vmatprep.subr.bf16.mxu0 0
    %1237 = vmatpush1.bf16.msra.mxu0 0
    %1238 = vmatprep.subr.bf16.mxu0 0
    %1239 = vmatpush1.bf16.msra.mxu0 0
    %1240 = vmatprep.subr.bf16.mxu0 0
    %1241 = vmatpush1.bf16.msra.mxu0 0
    %1242 = vmatprep.subr.bf16.mxu0 0
    %1243 = vmatpush1.bf16.msra.mxu0 0
    %1244 = vmatprep.subr.bf16.mxu0 0
    %1245 = vmatpush1.bf16.msra.mxu0 0
    %1246 = vmatprep.subr.bf16.mxu0 0
    %1247 = vmatpush1.bf16.msra.mxu0 0
    %1248 = vmatprep.mubr.bf16.mxu0 0
    %1249 = vmatmul.mubr.bf16.gmra.mrb[0].mxu0 %v1172
    %v1250 = vpop.f32.mrb[0].mxu0
    %v1251 = vadd.f32 0.0, %v1250
    %v1252 = vpop.f32.mrb[0].mxu0
    %v1253 = vadd.f32 0.0, %v1252
    %v1254 = vpop.f32.mrb[0].mxu0
    %v1255 = vadd.f32 0.0, %v1254
    %v1256 = vpop.f32.mrb[0].mxu0
    %v1257 = vadd.f32 0.0, %v1256
    %1258 = vdwg.mxu0
    %v1259 = vadd.f32 %v1164, %v1208
    %v1260 = vadd.f32 %v1165, %v1210
    %v1261 = vadd.f32 %v1166, %v1251
    %v1262 = vadd.f32 %v1167, %v1253
    %v1263 = vadd.f32 %v1168, %v1212
    %v1264 = vadd.f32 %v1169, %v1214
    %v1265 = vadd.f32 %v1170, %v1255
    %v1266 = vadd.f32 %v1171, %v1257
    %v1267 = vxor.u32 %v1259, 2147483648
    %v1268 = vxor.u32 %v1263, 2147483648
    %v1269 = vmul.f32 %v1267, 1.442695
    %v1270 = vpow.pop %v1269
    %v1271 = vmul.f32 %v1268, 1.442695
    %v1272 = vpow.pop %v1271
    %v1273 = vadd.f32 %v1270, 1.0
    %v1274 = vadd.f32 %v1272, 1.0
    %v1275 = vrcp.pop %v1273
    %v1276 = vmul.f32 1.0, %v1275
    %v1277 = vrcp.pop %v1274
    %v1278 = vmul.f32 1.0, %v1277
    %v1279 = vxor.u32 %v1260, 2147483648
    %v1280 = vxor.u32 %v1264, 2147483648
    %v1281 = vmul.f32 %v1279, 1.442695
    %v1282 = vpow.pop %v1281
    %v1283 = vmul.f32 %v1280, 1.442695
    %v1284 = vpow.pop %v1283
    %v1285 = vadd.f32 %v1282, 1.0
    %v1286 = vadd.f32 %v1284, 1.0
    %v1287 = vrcp.pop %v1285
    %v1288 = vmul.f32 1.0, %v1287
    %v1289 = vrcp.pop %v1286
    %v1290 = vmul.f32 1.0, %v1289
    %v1291 = vtanh.pop %v1261
    %v1292 = vtanh.pop %v1265
    %v1293 = vxor.u32 %v1262, 2147483648
    %v1294 = vxor.u32 %v1266, 2147483648
    %v1295 = vmul.f32 %v1293, 1.442695
    %v1296 = vpow.pop %v1295
    %v1297 = vmul.f32 %v1294, 1.442695
    %v1298 = vpow.pop %v1297
    %v1299 = vadd.f32 %v1296, 1.0
    %v1300 = vadd.f32 %v1298, 1.0
    %v1301 = vrcp.pop %v1299
    %v1302 = vmul.f32 1.0, %v1301
    %v1303 = vrcp.pop %v1300
    %v1304 = vmul.f32 1.0, %v1303
    %v1305 = vmul.f32 %v1288, %v1154
    %v1306 = vmul.f32 %v1290, %v1155
    %v1307 = vmul.f32 %v1276, %v1291
    %v1308 = vmul.f32 %v1278, %v1292
    %v1309 = vadd.f32 %v1305, %v1307
    %v1310 = vadd.f32 %v1306, %v1308
    %v1311 = vtanh.pop %v1309
    %v1312 = vtanh.pop %v1310
    %v1313 = vmul.f32 %v1302, %v1311
    %v1314 = vmul.f32 %v1304, %v1312
    %v1315 = vld [vmem:[%s634] sm:$0xff]
    %v1316 = vld [vmem:[%s634 + $0x8] sm:$0xff]
    %v1317 = vld [vmem:[%s634 + $0x10] sm:$0xff]
    %v1318 = vld [vmem:[%s634 + $0x18] sm:$0xff]
    %v1319 = vunpack.c.l.bf16 %v1315
    %v1320 = vunpack.c.l.bf16 %v1316
    %v1321 = vunpack.c.l.bf16 %v1317
    %v1322 = vunpack.c.l.bf16 %v1318
    %v1323 = vunpack.c.h.bf16 %v1315
    %v1324 = vunpack.c.h.bf16 %v1316
    %v1325 = vunpack.c.h.bf16 %v1317
    %v1326 = vunpack.c.h.bf16 %v1318
    %v1327 = vpack.c.bf16 %v1314, %v1313
    %1328 = vmatprep.subr.bf16.mxu0 %v800
    %1329 = vmatpush1.bf16.msra.mxu0 %v799
    %1330 = vmatprep.subr.bf16.mxu0 %v804
    %1331 = vmatpush1.bf16.msra.mxu0 %v803
    %1332 = vmatprep.subr.bf16.mxu0 %v808
    %1333 = vmatpush1.bf16.msra.mxu0 %v807
    %1334 = vmatprep.subr.bf16.mxu0 %v812
    %1335 = vmatpush1.bf16.msra.mxu0 %v811
    %1336 = vmatprep.subr.bf16.mxu0 %v816
    %1337 = vmatpush1.bf16.msra.mxu0 %v815
    %1338 = vmatprep.subr.bf16.mxu0 %v820
    %1339 = vmatpush1.bf16.msra.mxu0 %v819
    %1340 = vmatprep.subr.bf16.mxu0 %v824
    %1341 = vmatpush1.bf16.msra.mxu0 %v823
    %1342 = vmatprep.subr.bf16.mxu0 %v828
    %1343 = vmatpush1.bf16.msra.mxu0 %v827
    %1344 = vmatprep.subr.bf16.mxu0 0
    %1345 = vmatpush1.bf16.msra.mxu0 0
    %1346 = vmatprep.subr.bf16.mxu0 0
    %1347 = vmatpush1.bf16.msra.mxu0 0
    %1348 = vmatprep.subr.bf16.mxu0 0
    %1349 = vmatpush1.bf16.msra.mxu0 0
    %1350 = vmatprep.subr.bf16.mxu0 0
    %1351 = vmatpush1.bf16.msra.mxu0 0
    %1352 = vmatprep.subr.bf16.mxu0 0
    %1353 = vmatpush1.bf16.msra.mxu0 0
    %1354 = vmatprep.subr.bf16.mxu0 0
    %1355 = vmatpush1.bf16.msra.mxu0 0
    %1356 = vmatprep.subr.bf16.mxu0 0
    %1357 = vmatpush1.bf16.msra.mxu0 0
    %1358 = vmatprep.subr.bf16.mxu0 0
    %1359 = vmatpush1.bf16.msra.mxu0 0
    %1360 = vmatprep.mubr.bf16.mxu0 0
    %1361 = vmatmul.mubr.bf16.gmra.mrb[0].mxu0 %v1327
    %v1362 = vpop.f32.mrb[0].mxu0
    %v1363 = vadd.f32 0.0, %v1362
    %v1364 = vpop.f32.mrb[0].mxu0
    %v1365 = vadd.f32 0.0, %v1364
    %v1366 = vpop.f32.mrb[0].mxu0
    %v1367 = vadd.f32 0.0, %v1366
    %v1368 = vpop.f32.mrb[0].mxu0
    %v1369 = vadd.f32 0.0, %v1368
    %1370 = vdwg.mxu0
    %1371 = vmatprep.subr.bf16.mxu0 %v802
    %1372 = vmatpush1.bf16.msra.mxu0 %v801
    %1373 = vmatprep.subr.bf16.mxu0 %v806
    %1374 = vmatpush1.bf16.msra.mxu0 %v805
    %1375 = vmatprep.subr.bf16.mxu0 %v810
    %1376 = vmatpush1.bf16.msra.mxu0 %v809
    %1377 = vmatprep.subr.bf16.mxu0 %v814
    %1378 = vmatpush1.bf16.msra.mxu0 %v813
    %1379 = vmatprep.subr.bf16.mxu0 %v818
    %1380 = vmatpush1.bf16.msra.mxu0 %v817
    %1381 = vmatprep.subr.bf16.mxu0 %v822
    %1382 = vmatpush1.bf16.msra.mxu0 %v821
    %1383 = vmatprep.subr.bf16.mxu0 %v826
    %1384 = vmatpush1.bf16.msra.mxu0 %v825
    %1385 = vmatprep.subr.bf16.mxu0 %v830
    %1386 = vmatpush1.bf16.msra.mxu0 %v829
    %1387 = vmatprep.subr.bf16.mxu0 0
    %1388 = vmatpush1.bf16.msra.mxu0 0
    %1389 = vmatprep.subr.bf16.mxu0 0
    %1390 = vmatpush1.bf16.msra.mxu0 0
    %1391 = vmatprep.subr.bf16.mxu0 0
    %1392 = vmatpush1.bf16.msra.mxu0 0
    %1393 = vmatprep.subr.bf16.mxu0 0
    %1394 = vmatpush1.bf16.msra.mxu0 0
    %1395 = vmatprep.subr.bf16.mxu0 0
    %1396 = vmatpush1.bf16.msra.mxu0 0
    %1397 = vmatprep.subr.bf16.mxu0 0
    %1398 = vmatpush1.bf16.msra.mxu0 0
    %1399 = vmatprep.subr.bf16.mxu0 0
    %1400 = vmatpush1.bf16.msra.mxu0 0
    %1401 = vmatprep.subr.bf16.mxu0 0
    %1402 = vmatpush1.bf16.msra.mxu0 0
    %1403 = vmatprep.mubr.bf16.mxu0 0
    %1404 = vmatmul.mubr.bf16.gmra.mrb[0].mxu0 %v1327
    %v1405 = vpop.f32.mrb[0].mxu0
    %v1406 = vadd.f32 0.0, %v1405
    %v1407 = vpop.f32.mrb[0].mxu0
    %v1408 = vadd.f32 0.0, %v1407
    %v1409 = vpop.f32.mrb[0].mxu0
    %v1410 = vadd.f32 0.0, %v1409
    %v1411 = vpop.f32.mrb[0].mxu0
    %v1412 = vadd.f32 0.0, %v1411
    %1413 = vdwg.mxu0
    %v1414 = vadd.f32 %v1319, %v1363
    %v1415 = vadd.f32 %v1320, %v1365
    %v1416 = vadd.f32 %v1321, %v1406
    %v1417 = vadd.f32 %v1322, %v1408
    %v1418 = vadd.f32 %v1323, %v1367
    %v1419 = vadd.f32 %v1324, %v1369
    %v1420 = vadd.f32 %v1325, %v1410
    %v1421 = vadd.f32 %v1326, %v1412
    %v1422 = vxor.u32 %v1414, 2147483648
    %v1423 = vxor.u32 %v1418, 2147483648
    %v1424 = vmul.f32 %v1422, 1.442695
    %v1425 = vpow.pop %v1424
    %v1426 = vmul.f32 %v1423, 1.442695
    %v1427 = vpow.pop %v1426
    %v1428 = vadd.f32 %v1425, 1.0
    %v1429 = vadd.f32 %v1427, 1.0
    %v1430 = vrcp.pop %v1428
    %v1431 = vmul.f32 1.0, %v1430
    %v1432 = vrcp.pop %v1429
    %v1433 = vmul.f32 1.0, %v1432
    %v1434 = vxor.u32 %v1415, 2147483648
    %v1435 = vxor.u32 %v1419, 2147483648
    %v1436 = vmul.f32 %v1434, 1.442695
    %v1437 = vpow.pop %v1436
    %v1438 = vmul.f32 %v1435, 1.442695
    %v1439 = vpow.pop %v1438
    %v1440 = vadd.f32 %v1437, 1.0
    %v1441 = vadd.f32 %v1439, 1.0
    %v1442 = vrcp.pop %v1440
    %v1443 = vmul.f32 1.0, %v1442
    %v1444 = vrcp.pop %v1441
    %v1445 = vmul.f32 1.0, %v1444
    %v1446 = vtanh.pop %v1416
    %v1447 = vtanh.pop %v1420
    %v1448 = vxor.u32 %v1417, 2147483648
    %v1449 = vxor.u32 %v1421, 2147483648
    %v1450 = vmul.f32 %v1448, 1.442695
    %v1451 = vpow.pop %v1450
    %v1452 = vmul.f32 %v1449, 1.442695
    %v1453 = vpow.pop %v1452
    %v1454 = vadd.f32 %v1451, 1.0
    %v1455 = vadd.f32 %v1453, 1.0
    %v1456 = vrcp.pop %v1454
    %v1457 = vmul.f32 1.0, %v1456
    %v1458 = vrcp.pop %v1455
    %v1459 = vmul.f32 1.0, %v1458
    %v1460 = vmul.f32 %v1443, %v1309
    %v1461 = vmul.f32 %v1445, %v1310
    %v1462 = vmul.f32 %v1431, %v1446
    %v1463 = vmul.f32 %v1433, %v1447
    %v1464 = vadd.f32 %v1460, %v1462
    %v1465 = vadd.f32 %v1461, %v1463
    %v1466 = vtanh.pop %v1464
    %v1467 = vtanh.pop %v1465
    %v1468 = vmul.f32 %v1457, %v1466
    %v1469 = vmul.f32 %v1459, %v1467
    %v1470 = vld [vmem:[%s639] sm:$0xff]
    %v1471 = vld [vmem:[%s639 + $0x8] sm:$0xff]
    %v1472 = vld [vmem:[%s639 + $0x10] sm:$0xff]
    %v1473 = vld [vmem:[%s639 + $0x18] sm:$0xff]
    %v1474 = vunpack.c.l.bf16 %v1470
    %v1475 = vunpack.c.l.bf16 %v1471
    %v1476 = vunpack.c.l.bf16 %v1472
    %v1477 = vunpack.c.l.bf16 %v1473
    %v1478 = vunpack.c.h.bf16 %v1470
    %v1479 = vunpack.c.h.bf16 %v1471
    %v1480 = vunpack.c.h.bf16 %v1472
    %v1481 = vunpack.c.h.bf16 %v1473
    %v1482 = vpack.c.bf16 %v1469, %v1468
    %1483 = vmatprep.subr.bf16.mxu0 %v800
    %1484 = vmatpush1.bf16.msra.mxu0 %v799
    %1485 = vmatprep.subr.bf16.mxu0 %v804
    %1486 = vmatpush1.bf16.msra.mxu0 %v803
    %1487 = vmatprep.subr.bf16.mxu0 %v808
    %1488 = vmatpush1.bf16.msra.mxu0 %v807
    %1489 = vmatprep.subr.bf16.mxu0 %v812
    %1490 = vmatpush1.bf16.msra.mxu0 %v811
    %1491 = vmatprep.subr.bf16.mxu0 %v816
    %1492 = vmatpush1.bf16.msra.mxu0 %v815
    %1493 = vmatprep.subr.bf16.mxu0 %v820
    %1494 = vmatpush1.bf16.msra.mxu0 %v819
    %1495 = vmatprep.subr.bf16.mxu0 %v824
    %1496 = vmatpush1.bf16.msra.mxu0 %v823
    %1497 = vmatprep.subr.bf16.mxu0 %v828
    %1498 = vmatpush1.bf16.msra.mxu0 %v827
    %1499 = vmatprep.subr.bf16.mxu0 0
    %1500 = vmatpush1.bf16.msra.mxu0 0
    %1501 = vmatprep.subr.bf16.mxu0 0
    %1502 = vmatpush1.bf16.msra.mxu0 0
    %1503 = vmatprep.subr.bf16.mxu0 0
    %1504 = vmatpush1.bf16.msra.mxu0 0
    %1505 = vmatprep.subr.bf16.mxu0 0
    %1506 = vmatpush1.bf16.msra.mxu0 0
    %1507 = vmatprep.subr.bf16.mxu0 0
    %1508 = vmatpush1.bf16.msra.mxu0 0
    %1509 = vmatprep.subr.bf16.mxu0 0
    %1510 = vmatpush1.bf16.msra.mxu0 0
    %1511 = vmatprep.subr.bf16.mxu0 0
    %1512 = vmatpush1.bf16.msra.mxu0 0
    %1513 = vmatprep.subr.bf16.mxu0 0
    %1514 = vmatpush1.bf16.msra.mxu0 0
    %1515 = vmatprep.mubr.bf16.mxu0 0
    %1516 = vmatmul.mubr.bf16.gmra.mrb[0].mxu0 %v1482
    %v1517 = vpop.f32.mrb[0].mxu0
    %v1518 = vadd.f32 0.0, %v1517
    %v1519 = vpop.f32.mrb[0].mxu0
    %v1520 = vadd.f32 0.0, %v1519
    %v1521 = vpop.f32.mrb[0].mxu0
    %v1522 = vadd.f32 0.0, %v1521
    %v1523 = vpop.f32.mrb[0].mxu0
    %v1524 = vadd.f32 0.0, %v1523
    %1525 = vdwg.mxu0
    %1526 = vmatprep.subr.bf16.mxu0 %v802
    %1527 = vmatpush1.bf16.msra.mxu0 %v801
    %1528 = vmatprep.subr.bf16.mxu0 %v806
    %1529 = vmatpush1.bf16.msra.mxu0 %v805
    %1530 = vmatprep.subr.bf16.mxu0 %v810
    %1531 = vmatpush1.bf16.msra.mxu0 %v809
    %1532 = vmatprep.subr.bf16.mxu0 %v814
    %1533 = vmatpush1.bf16.msra.mxu0 %v813
    %1534 = vmatprep.subr.bf16.mxu0 %v818
    %1535 = vmatpush1.bf16.msra.mxu0 %v817
    %1536 = vmatprep.subr.bf16.mxu0 %v822
    %1537 = vmatpush1.bf16.msra.mxu0 %v821
    %1538 = vmatprep.subr.bf16.mxu0 %v826
    %1539 = vmatpush1.bf16.msra.mxu0 %v825
    %1540 = vmatprep.subr.bf16.mxu0 %v830
    %1541 = vmatpush1.bf16.msra.mxu0 %v829
    %1542 = vmatprep.subr.bf16.mxu0 0
    %1543 = vmatpush1.bf16.msra.mxu0 0
    %1544 = vmatprep.subr.bf16.mxu0 0
    %1545 = vmatpush1.bf16.msra.mxu0 0
    %1546 = vmatprep.subr.bf16.mxu0 0
    %1547 = vmatpush1.bf16.msra.mxu0 0
    %1548 = vmatprep.subr.bf16.mxu0 0
    %1549 = vmatpush1.bf16.msra.mxu0 0
    %1550 = vmatprep.subr.bf16.mxu0 0
    %1551 = vmatpush1.bf16.msra.mxu0 0
    %1552 = vmatprep.subr.bf16.mxu0 0
    %1553 = vmatpush1.bf16.msra.mxu0 0
    %1554 = vmatprep.subr.bf16.mxu0 0
    %1555 = vmatpush1.bf16.msra.mxu0 0
    %1556 = vmatprep.subr.bf16.mxu0 0
    %1557 = vmatpush1.bf16.msra.mxu0 0
    %1558 = vmatprep.mubr.bf16.mxu0 0
    %1559 = vmatmul.mubr.bf16.gmra.mrb[0].mxu0 %v1482
    %v1560 = vpop.f32.mrb[0].mxu0
    %v1561 = vadd.f32 0.0, %v1560
    %v1562 = vpop.f32.mrb[0].mxu0
    %v1563 = vadd.f32 0.0, %v1562
    %v1564 = vpop.f32.mrb[0].mxu0
    %v1565 = vadd.f32 0.0, %v1564
    %v1566 = vpop.f32.mrb[0].mxu0
    %v1567 = vadd.f32 0.0, %v1566
    %1568 = vdwg.mxu0
    %v1569 = vadd.f32 %v1474, %v1518
    %v1570 = vadd.f32 %v1475, %v1520
    %v1571 = vadd.f32 %v1476, %v1561
    %v1572 = vadd.f32 %v1477, %v1563
    %v1573 = vadd.f32 %v1478, %v1522
    %v1574 = vadd.f32 %v1479, %v1524
    %v1575 = vadd.f32 %v1480, %v1565
    %v1576 = vadd.f32 %v1481, %v1567
    %v1577 = vxor.u32 %v1569, 2147483648
    %v1578 = vxor.u32 %v1573, 2147483648
    %v1579 = vmul.f32 %v1577, 1.442695
    %v1580 = vpow.pop %v1579
    %v1581 = vmul.f32 %v1578, 1.442695
    %v1582 = vpow.pop %v1581
    %v1583 = vadd.f32 %v1580, 1.0
    %v1584 = vadd.f32 %v1582, 1.0
    %v1585 = vrcp.pop %v1583
    %v1586 = vmul.f32 1.0, %v1585
    %v1587 = vrcp.pop %v1584
    %v1588 = vmul.f32 1.0, %v1587
    %v1589 = vxor.u32 %v1570, 2147483648
    %v1590 = vxor.u32 %v1574, 2147483648
    %v1591 = vmul.f32 %v1589, 1.442695
    %v1592 = vpow.pop %v1591
    %v1593 = vmul.f32 %v1590, 1.442695
    %v1594 = vpow.pop %v1593
    %v1595 = vadd.f32 %v1592, 1.0
    %v1596 = vadd.f32 %v1594, 1.0
    %v1597 = vrcp.pop %v1595
    %v1598 = vmul.f32 1.0, %v1597
    %v1599 = vrcp.pop %v1596
    %v1600 = vmul.f32 1.0, %v1599
    %v1601 = vtanh.pop %v1571
    %v1602 = vtanh.pop %v1575
    %v1603 = vxor.u32 %v1572, 2147483648
    %v1604 = vxor.u32 %v1576, 2147483648
    %v1605 = vmul.f32 %v1603, 1.442695
    %v1606 = vpow.pop %v1605
    %v1607 = vmul.f32 %v1604, 1.442695
    %v1608 = vpow.pop %v1607
    %v1609 = vadd.f32 %v1606, 1.0
    %v1610 = vadd.f32 %v1608, 1.0
    %v1611 = vrcp.pop %v1609
    %v1612 = vmul.f32 1.0, %v1611
    %v1613 = vrcp.pop %v1610
    %v1614 = vmul.f32 1.0, %v1613
    %v1615 = vmul.f32 %v1598, %v1464
    %v1616 = vmul.f32 %v1600, %v1465
    %v1617 = vmul.f32 %v1586, %v1601
    %v1618 = vmul.f32 %v1588, %v1602
    %v1619 = vadd.f32 %v1615, %v1617
    %v1620 = vadd.f32 %v1616, %v1618
    %v1621 = vtanh.pop %v1619
    %v1622 = vtanh.pop %v1620
    %v1623 = vmul.f32 %v1612, %v1621
    %v1624 = vmul.f32 %v1614, %v1622
    %v1625 = vld [vmem:[%s644] sm:$0xff]
    %v1626 = vld [vmem:[%s644 + $0x8] sm:$0xff]
    %v1627 = vld [vmem:[%s644 + $0x10] sm:$0xff]
    %v1628 = vld [vmem:[%s644 + $0x18] sm:$0xff]
    %v1629 = vunpack.c.l.bf16 %v1625
    %v1630 = vunpack.c.l.bf16 %v1626
    %v1631 = vunpack.c.l.bf16 %v1627
    %v1632 = vunpack.c.l.bf16 %v1628
    %v1633 = vunpack.c.h.bf16 %v1625
    %v1634 = vunpack.c.h.bf16 %v1626
    %v1635 = vunpack.c.h.bf16 %v1627
    %v1636 = vunpack.c.h.bf16 %v1628
    %v1637 = vpack.c.bf16 %v1624, %v1623
    %1638 = vmatprep.subr.bf16.mxu0 %v800
    %1639 = vmatpush1.bf16.msra.mxu0 %v799
    %1640 = vmatprep.subr.bf16.mxu0 %v804
    %1641 = vmatpush1.bf16.msra.mxu0 %v803
    %1642 = vmatprep.subr.bf16.mxu0 %v808
    %1643 = vmatpush1.bf16.msra.mxu0 %v807
    %1644 = vmatprep.subr.bf16.mxu0 %v812
    %1645 = vmatpush1.bf16.msra.mxu0 %v811
    %1646 = vmatprep.subr.bf16.mxu0 %v816
    %1647 = vmatpush1.bf16.msra.mxu0 %v815
    %1648 = vmatprep.subr.bf16.mxu0 %v820
    %1649 = vmatpush1.bf16.msra.mxu0 %v819
    %1650 = vmatprep.subr.bf16.mxu0 %v824
    %1651 = vmatpush1.bf16.msra.mxu0 %v823
    %1652 = vmatprep.subr.bf16.mxu0 %v828
    %1653 = vmatpush1.bf16.msra.mxu0 %v827
    %1654 = vmatprep.subr.bf16.mxu0 0
    %1655 = vmatpush1.bf16.msra.mxu0 0
    %1656 = vmatprep.subr.bf16.mxu0 0
    %1657 = vmatpush1.bf16.msra.mxu0 0
    %1658 = vmatprep.subr.bf16.mxu0 0
    %1659 = vmatpush1.bf16.msra.mxu0 0
    %1660 = vmatprep.subr.bf16.mxu0 0
    %1661 = vmatpush1.bf16.msra.mxu0 0
    %1662 = vmatprep.subr.bf16.mxu0 0
    %1663 = vmatpush1.bf16.msra.mxu0 0
    %1664 = vmatprep.subr.bf16.mxu0 0
    %1665 = vmatpush1.bf16.msra.mxu0 0
    %1666 = vmatprep.subr.bf16.mxu0 0
    %1667 = vmatpush1.bf16.msra.mxu0 0
    %1668 = vmatprep.subr.bf16.mxu0 0
    %1669 = vmatpush1.bf16.msra.mxu0 0
    %1670 = vmatprep.mubr.bf16.mxu0 0
    %1671 = vmatmul.mubr.bf16.gmra.mrb[0].mxu0 %v1637
    %v1672 = vpop.f32.mrb[0].mxu0
    %v1673 = vadd.f32 0.0, %v1672
    %v1674 = vpop.f32.mrb[0].mxu0
    %v1675 = vadd.f32 0.0, %v1674
    %v1676 = vpop.f32.mrb[0].mxu0
    %v1677 = vadd.f32 0.0, %v1676
    %v1678 = vpop.f32.mrb[0].mxu0
    %v1679 = vadd.f32 0.0, %v1678
    %1680 = vdwg.mxu0
    %1681 = vmatprep.subr.bf16.mxu0 %v802
    %1682 = vmatpush1.bf16.msra.mxu0 %v801
    %1683 = vmatprep.subr.bf16.mxu0 %v806
    %1684 = vmatpush1.bf16.msra.mxu0 %v805
    %1685 = vmatprep.subr.bf16.mxu0 %v810
    %1686 = vmatpush1.bf16.msra.mxu0 %v809
    %1687 = vmatprep.subr.bf16.mxu0 %v814
    %1688 = vmatpush1.bf16.msra.mxu0 %v813
    %1689 = vmatprep.subr.bf16.mxu0 %v818
    %1690 = vmatpush1.bf16.msra.mxu0 %v817
    %1691 = vmatprep.subr.bf16.mxu0 %v822
    %1692 = vmatpush1.bf16.msra.mxu0 %v821
    %1693 = vmatprep.subr.bf16.mxu0 %v826
    %1694 = vmatpush1.bf16.msra.mxu0 %v825
    %1695 = vmatprep.subr.bf16.mxu0 %v830
    %1696 = vmatpush1.bf16.msra.mxu0 %v829
    %1697 = vmatprep.subr.bf16.mxu0 0
    %1698 = vmatpush1.bf16.msra.mxu0 0
    %1699 = vmatprep.subr.bf16.mxu0 0
    %1700 = vmatpush1.bf16.msra.mxu0 0
    %1701 = vmatprep.subr.bf16.mxu0 0
    %1702 = vmatpush1.bf16.msra.mxu0 0
    %1703 = vmatprep.subr.bf16.mxu0 0
    %1704 = vmatpush1.bf16.msra.mxu0 0
    %1705 = vmatprep.subr.bf16.mxu0 0
    %1706 = vmatpush1.bf16.msra.mxu0 0
    %1707 = vmatprep.subr.bf16.mxu0 0
    %1708 = vmatpush1.bf16.msra.mxu0 0
    %1709 = vmatprep.subr.bf16.mxu0 0
    %1710 = vmatpush1.bf16.msra.mxu0 0
    %1711 = vmatprep.subr.bf16.mxu0 0
    %1712 = vmatpush1.bf16.msra.mxu0 0
    %1713 = vmatprep.mubr.bf16.mxu0 0
    %1714 = vmatmul.mubr.bf16.gmra.mrb[0].mxu0 %v1637
    %v1715 = vpop.f32.mrb[0].mxu0
    %v1716 = vadd.f32 0.0, %v1715
    %v1717 = vpop.f32.mrb[0].mxu0
    %v1718 = vadd.f32 0.0, %v1717
    %v1719 = vpop.f32.mrb[0].mxu0
    %v1720 = vadd.f32 0.0, %v1719
    %v1721 = vpop.f32.mrb[0].mxu0
    %v1722 = vadd.f32 0.0, %v1721
    %1723 = vdwg.mxu0
    %v1724 = vadd.f32 %v1629, %v1673
    %v1725 = vadd.f32 %v1630, %v1675
    %v1726 = vadd.f32 %v1631, %v1716
    %v1727 = vadd.f32 %v1632, %v1718
    %v1728 = vadd.f32 %v1633, %v1677
    %v1729 = vadd.f32 %v1634, %v1679
    %v1730 = vadd.f32 %v1635, %v1720
    %v1731 = vadd.f32 %v1636, %v1722
    %v1732 = vxor.u32 %v1724, 2147483648
    %v1733 = vxor.u32 %v1728, 2147483648
    %v1734 = vmul.f32 %v1732, 1.442695
    %v1735 = vpow.pop %v1734
    %v1736 = vmul.f32 %v1733, 1.442695
    %v1737 = vpow.pop %v1736
    %v1738 = vadd.f32 %v1735, 1.0
    %v1739 = vadd.f32 %v1737, 1.0
    %v1740 = vrcp.pop %v1738
    %v1741 = vmul.f32 1.0, %v1740
    %v1742 = vrcp.pop %v1739
    %v1743 = vmul.f32 1.0, %v1742
    %v1744 = vxor.u32 %v1725, 2147483648
    %v1745 = vxor.u32 %v1729, 2147483648
    %v1746 = vmul.f32 %v1744, 1.442695
    %v1747 = vpow.pop %v1746
    %v1748 = vmul.f32 %v1745, 1.442695
    %v1749 = vpow.pop %v1748
    %v1750 = vadd.f32 %v1747, 1.0
    %v1751 = vadd.f32 %v1749, 1.0
    %v1752 = vrcp.pop %v1750
    %v1753 = vmul.f32 1.0, %v1752
    %v1754 = vrcp.pop %v1751
    %v1755 = vmul.f32 1.0, %v1754
    %v1756 = vtanh.pop %v1726
    %v1757 = vtanh.pop %v1730
    %v1758 = vxor.u32 %v1727, 2147483648
    %v1759 = vxor.u32 %v1731, 2147483648
    %v1760 = vmul.f32 %v1758, 1.442695
    %v1761 = vpow.pop %v1760
    %v1762 = vmul.f32 %v1759, 1.442695
    %v1763 = vpow.pop %v1762
    %v1764 = vadd.f32 %v1761, 1.0
    %v1765 = vadd.f32 %v1763, 1.0
    %v1766 = vrcp.pop %v1764
    %v1767 = vmul.f32 1.0, %v1766
    %v1768 = vrcp.pop %v1765
    %v1769 = vmul.f32 1.0, %v1768
    %v1770 = vmul.f32 %v1753, %v1619
    %v1771 = vmul.f32 %v1755, %v1620
    %v1772 = vmul.f32 %v1741, %v1756
    %v1773 = vmul.f32 %v1743, %v1757
    %v1774 = vadd.f32 %v1770, %v1772
    %v1775 = vadd.f32 %v1771, %v1773
    %v1776 = vtanh.pop %v1774
    %v1777 = vtanh.pop %v1775
    %v1778 = vmul.f32 %v1767, %v1776
    %v1779 = vmul.f32 %v1769, %v1777
    %v1780 = vld [vmem:[%s649] sm:$0xff]
    %v1781 = vld [vmem:[%s649 + $0x8] sm:$0xff]
    %v1782 = vld [vmem:[%s649 + $0x10] sm:$0xff]
    %v1783 = vld [vmem:[%s649 + $0x18] sm:$0xff]
    %v1784 = vunpack.c.l.bf16 %v1780
    %v1785 = vunpack.c.l.bf16 %v1781
    %v1786 = vunpack.c.l.bf16 %v1782
    %v1787 = vunpack.c.l.bf16 %v1783
    %v1788 = vunpack.c.h.bf16 %v1780
    %v1789 = vunpack.c.h.bf16 %v1781
    %v1790 = vunpack.c.h.bf16 %v1782
    %v1791 = vunpack.c.h.bf16 %v1783
    %v1792 = vpack.c.bf16 %v1779, %v1778
    %1793 = vmatprep.subr.bf16.mxu0 %v800
    %1794 = vmatpush1.bf16.msra.mxu0 %v799
    %1795 = vmatprep.subr.bf16.mxu0 %v804
    %1796 = vmatpush1.bf16.msra.mxu0 %v803
    %1797 = vmatprep.subr.bf16.mxu0 %v808
    %1798 = vmatpush1.bf16.msra.mxu0 %v807
    %1799 = vmatprep.subr.bf16.mxu0 %v812
    %1800 = vmatpush1.bf16.msra.mxu0 %v811
    %1801 = vmatprep.subr.bf16.mxu0 %v816
    %1802 = vmatpush1.bf16.msra.mxu0 %v815
    %1803 = vmatprep.subr.bf16.mxu0 %v820
    %1804 = vmatpush1.bf16.msra.mxu0 %v819
    %1805 = vmatprep.subr.bf16.mxu0 %v824
    %1806 = vmatpush1.bf16.msra.mxu0 %v823
    %1807 = vmatprep.subr.bf16.mxu0 %v828
    %1808 = vmatpush1.bf16.msra.mxu0 %v827
    %1809 = vmatprep.subr.bf16.mxu0 0
    %1810 = vmatpush1.bf16.msra.mxu0 0
    %1811 = vmatprep.subr.bf16.mxu0 0
    %1812 = vmatpush1.bf16.msra.mxu0 0
    %1813 = vmatprep.subr.bf16.mxu0 0
    %1814 = vmatpush1.bf16.msra.mxu0 0
    %1815 = vmatprep.subr.bf16.mxu0 0
    %1816 = vmatpush1.bf16.msra.mxu0 0
    %1817 = vmatprep.subr.bf16.mxu0 0
    %1818 = vmatpush1.bf16.msra.mxu0 0
    %1819 = vmatprep.subr.bf16.mxu0 0
    %1820 = vmatpush1.bf16.msra.mxu0 0
    %1821 = vmatprep.subr.bf16.mxu0 0
    %1822 = vmatpush1.bf16.msra.mxu0 0
    %1823 = vmatprep.subr.bf16.mxu0 0
    %1824 = vmatpush1.bf16.msra.mxu0 0
    %1825 = vmatprep.mubr.bf16.mxu0 0
    %1826 = vmatmul.mubr.bf16.gmra.mrb[0].mxu0 %v1792
    %v1827 = vpop.f32.mrb[0].mxu0
    %v1828 = vadd.f32 0.0, %v1827
    %v1829 = vpop.f32.mrb[0].mxu0
    %v1830 = vadd.f32 0.0, %v1829
    %v1831 = vpop.f32.mrb[0].mxu0
    %v1832 = vadd.f32 0.0, %v1831
    %v1833 = vpop.f32.mrb[0].mxu0
    %v1834 = vadd.f32 0.0, %v1833
    %1835 = vdwg.mxu0
    %1836 = vmatprep.subr.bf16.mxu0 %v802
    %1837 = vmatpush1.bf16.msra.mxu0 %v801
    %1838 = vmatprep.subr.bf16.mxu0 %v806
    %1839 = vmatpush1.bf16.msra.mxu0 %v805
    %1840 = vmatprep.subr.bf16.mxu0 %v810
    %1841 = vmatpush1.bf16.msra.mxu0 %v809
    %1842 = vmatprep.subr.bf16.mxu0 %v814
    %1843 = vmatpush1.bf16.msra.mxu0 %v813
    %1844 = vmatprep.subr.bf16.mxu0 %v818
    %1845 = vmatpush1.bf16.msra.mxu0 %v817
    %1846 = vmatprep.subr.bf16.mxu0 %v822
    %1847 = vmatpush1.bf16.msra.mxu0 %v821
    %1848 = vmatprep.subr.bf16.mxu0 %v826
    %1849 = vmatpush1.bf16.msra.mxu0 %v825
    %1850 = vmatprep.subr.bf16.mxu0 %v830
    %1851 = vmatpush1.bf16.msra.mxu0 %v829
    %1852 = vmatprep.subr.bf16.mxu0 0
    %1853 = vmatpush1.bf16.msra.mxu0 0
    %1854 = vmatprep.subr.bf16.mxu0 0
    %1855 = vmatpush1.bf16.msra.mxu0 0
    %1856 = vmatprep.subr.bf16.mxu0 0
    %1857 = vmatpush1.bf16.msra.mxu0 0
    %1858 = vmatprep.subr.bf16.mxu0 0
    %1859 = vmatpush1.bf16.msra.mxu0 0
    %1860 = vmatprep.subr.bf16.mxu0 0
    %1861 = vmatpush1.bf16.msra.mxu0 0
    %1862 = vmatprep.subr.bf16.mxu0 0
    %1863 = vmatpush1.bf16.msra.mxu0 0
    %1864 = vmatprep.subr.bf16.mxu0 0
    %1865 = vmatpush1.bf16.msra.mxu0 0
    %1866 = vmatprep.subr.bf16.mxu0 0
    %1867 = vmatpush1.bf16.msra.mxu0 0
    %1868 = vmatprep.mubr.bf16.mxu0 0
    %1869 = vmatmul.mubr.bf16.gmra.mrb[0].mxu0 %v1792
    %v1870 = vpop.f32.mrb[0].mxu0
    %v1871 = vadd.f32 0.0, %v1870
    %v1872 = vpop.f32.mrb[0].mxu0
    %v1873 = vadd.f32 0.0, %v1872
    %v1874 = vpop.f32.mrb[0].mxu0
    %v1875 = vadd.f32 0.0, %v1874
    %v1876 = vpop.f32.mrb[0].mxu0
    %v1877 = vadd.f32 0.0, %v1876
    %1878 = vdwg.mxu0
    %v1879 = vadd.f32 %v1784, %v1828
    %v1880 = vadd.f32 %v1785, %v1830
    %v1881 = vadd.f32 %v1786, %v1871
    %v1882 = vadd.f32 %v1787, %v1873
    %v1883 = vadd.f32 %v1788, %v1832
    %v1884 = vadd.f32 %v1789, %v1834
    %v1885 = vadd.f32 %v1790, %v1875
    %v1886 = vadd.f32 %v1791, %v1877
    %v1887 = vxor.u32 %v1879, 2147483648
    %v1888 = vxor.u32 %v1883, 2147483648
    %v1889 = vmul.f32 %v1887, 1.442695
    %v1890 = vpow.pop %v1889
    %v1891 = vmul.f32 %v1888, 1.442695
    %v1892 = vpow.pop %v1891
    %v1893 = vadd.f32 %v1890, 1.0
    %v1894 = vadd.f32 %v1892, 1.0
    %v1895 = vrcp.pop %v1893
    %v1896 = vmul.f32 1.0, %v1895
    %v1897 = vrcp.pop %v1894
    %v1898 = vmul.f32 1.0, %v1897
    %v1899 = vxor.u32 %v1880, 2147483648
    %v1900 = vxor.u32 %v1884, 2147483648
    %v1901 = vmul.f32 %v1899, 1.442695
    %v1902 = vpow.pop %v1901
    %v1903 = vmul.f32 %v1900, 1.442695
    %v1904 = vpow.pop %v1903
    %v1905 = vadd.f32 %v1902, 1.0
    %v1906 = vadd.f32 %v1904, 1.0
    %v1907 = vrcp.pop %v1905
    %v1908 = vmul.f32 1.0, %v1907
    %v1909 = vrcp.pop %v1906
    %v1910 = vmul.f32 1.0, %v1909
    %v1911 = vtanh.pop %v1881
    %v1912 = vtanh.pop %v1885
    %v1913 = vxor.u32 %v1882, 2147483648
    %v1914 = vxor.u32 %v1886, 2147483648
    %v1915 = vmul.f32 %v1913, 1.442695
    %v1916 = vpow.pop %v1915
    %v1917 = vmul.f32 %v1914, 1.442695
    %v1918 = vpow.pop %v1917
    %v1919 = vadd.f32 %v1916, 1.0
    %v1920 = vadd.f32 %v1918, 1.0
    %v1921 = vrcp.pop %v1919
    %v1922 = vmul.f32 1.0, %v1921
    %v1923 = vrcp.pop %v1920
    %v1924 = vmul.f32 1.0, %v1923
    %v1925 = vmul.f32 %v1908, %v1774
    %v1926 = vmul.f32 %v1910, %v1775
    %v1927 = vmul.f32 %v1896, %v1911
    %v1928 = vmul.f32 %v1898, %v1912
    %v1929 = vadd.f32 %v1925, %v1927
    %v1930 = vadd.f32 %v1926, %v1928
    %v1931 = vtanh.pop %v1929
    %v1932 = vtanh.pop %v1930
    %v1933 = vmul.f32 %v1922, %v1931
    %v1934 = vmul.f32 %v1924, %v1932
    %v1935 = vld [vmem:[%s654] sm:$0xff]
    %v1936 = vld [vmem:[%s654 + $0x8] sm:$0xff]
    %v1937 = vld [vmem:[%s654 + $0x10] sm:$0xff]
    %v1938 = vld [vmem:[%s654 + $0x18] sm:$0xff]
    %v1939 = vunpack.c.l.bf16 %v1935
    %v1940 = vunpack.c.l.bf16 %v1936
    %v1941 = vunpack.c.l.bf16 %v1937
    %v1942 = vunpack.c.l.bf16 %v1938
    %v1943 = vunpack.c.h.bf16 %v1935
    %v1944 = vunpack.c.h.bf16 %v1936
    %v1945 = vunpack.c.h.bf16 %v1937
    %v1946 = vunpack.c.h.bf16 %v1938
    %v1947 = vpack.c.bf16 %v1934, %v1933
    %1948 = vmatprep.subr.bf16.mxu0 %v800
    %1949 = vmatpush1.bf16.msra.mxu0 %v799
    %1950 = vmatprep.subr.bf16.mxu0 %v804
    %1951 = vmatpush1.bf16.msra.mxu0 %v803
    %1952 = vmatprep.subr.bf16.mxu0 %v808
    %1953 = vmatpush1.bf16.msra.mxu0 %v807
    %1954 = vmatprep.subr.bf16.mxu0 %v812
    %1955 = vmatpush1.bf16.msra.mxu0 %v811
    %1956 = vmatprep.subr.bf16.mxu0 %v816
    %1957 = vmatpush1.bf16.msra.mxu0 %v815
    %1958 = vmatprep.subr.bf16.mxu0 %v820
    %1959 = vmatpush1.bf16.msra.mxu0 %v819
    %1960 = vmatprep.subr.bf16.mxu0 %v824
    %1961 = vmatpush1.bf16.msra.mxu0 %v823
    %1962 = vmatprep.subr.bf16.mxu0 %v828
    %1963 = vmatpush1.bf16.msra.mxu0 %v827
    %1964 = vmatprep.subr.bf16.mxu0 0
    %1965 = vmatpush1.bf16.msra.mxu0 0
    %1966 = vmatprep.subr.bf16.mxu0 0
    %1967 = vmatpush1.bf16.msra.mxu0 0
    %1968 = vmatprep.subr.bf16.mxu0 0
    %1969 = vmatpush1.bf16.msra.mxu0 0
    %1970 = vmatprep.subr.bf16.mxu0 0
    %1971 = vmatpush1.bf16.msra.mxu0 0
    %1972 = vmatprep.subr.bf16.mxu0 0
    %1973 = vmatpush1.bf16.msra.mxu0 0
    %1974 = vmatprep.subr.bf16.mxu0 0
    %1975 = vmatpush1.bf16.msra.mxu0 0
    %1976 = vmatprep.subr.bf16.mxu0 0
    %1977 = vmatpush1.bf16.msra.mxu0 0
    %1978 = vmatprep.subr.bf16.mxu0 0
    %1979 = vmatpush1.bf16.msra.mxu0 0
    %1980 = vmatprep.mubr.bf16.mxu0 0
    %1981 = vmatmul.mubr.bf16.gmra.mrb[0].mxu0 %v1947
    %v1982 = vpop.f32.mrb[0].mxu0
    %v1983 = vadd.f32 0.0, %v1982
    %v1984 = vpop.f32.mrb[0].mxu0
    %v1985 = vadd.f32 0.0, %v1984
    %v1986 = vpop.f32.mrb[0].mxu0
    %v1987 = vadd.f32 0.0, %v1986
    %v1988 = vpop.f32.mrb[0].mxu0
    %v1989 = vadd.f32 0.0, %v1988
    %1990 = vdwg.mxu0
    %1991 = vmatprep.subr.bf16.mxu0 %v802
    %1992 = vmatpush1.bf16.msra.mxu0 %v801
    %1993 = vmatprep.subr.bf16.mxu0 %v806
    %1994 = vmatpush1.bf16.msra.mxu0 %v805
    %1995 = vmatprep.subr.bf16.mxu0 %v810
    %1996 = vmatpush1.bf16.msra.mxu0 %v809
    %1997 = vmatprep.subr.bf16.mxu0 %v814
    %1998 = vmatpush1.bf16.msra.mxu0 %v813
    %1999 = vmatprep.subr.bf16.mxu0 %v818
    %2000 = vmatpush1.bf16.msra.mxu0 %v817
    %2001 = vmatprep.subr.bf16.mxu0 %v822
    %2002 = vmatpush1.bf16.msra.mxu0 %v821
    %2003 = vmatprep.subr.bf16.mxu0 %v826
    %2004 = vmatpush1.bf16.msra.mxu0 %v825
    %2005 = vmatprep.subr.bf16.mxu0 %v830
    %2006 = vmatpush1.bf16.msra.mxu0 %v829
    %2007 = vmatprep.subr.bf16.mxu0 0
    %2008 = vmatpush1.bf16.msra.mxu0 0
    %2009 = vmatprep.subr.bf16.mxu0 0
    %2010 = vmatpush1.bf16.msra.mxu0 0
    %2011 = vmatprep.subr.bf16.mxu0 0
    %2012 = vmatpush1.bf16.msra.mxu0 0
    %2013 = vmatprep.subr.bf16.mxu0 0
    %2014 = vmatpush1.bf16.msra.mxu0 0
    %2015 = vmatprep.subr.bf16.mxu0 0
    %2016 = vmatpush1.bf16.msra.mxu0 0
    %2017 = vmatprep.subr.bf16.mxu0 0
    %2018 = vmatpush1.bf16.msra.mxu0 0
    %2019 = vmatprep.subr.bf16.mxu0 0
    %2020 = vmatpush1.bf16.msra.mxu0 0
    %2021 = vmatprep.subr.bf16.mxu0 0
    %2022 = vmatpush1.bf16.msra.mxu0 0
    %2023 = vmatprep.mubr.bf16.mxu0 0
    %2024 = vmatmul.mubr.bf16.gmra.mrb[0].mxu0 %v1947
    %v2025 = vpop.f32.mrb[0].mxu0
    %v2026 = vadd.f32 0.0, %v2025
    %v2027 = vpop.f32.mrb[0].mxu0
    %v2028 = vadd.f32 0.0, %v2027
    %v2029 = vpop.f32.mrb[0].mxu0
    %v2030 = vadd.f32 0.0, %v2029
    %v2031 = vpop.f32.mrb[0].mxu0
    %v2032 = vadd.f32 0.0, %v2031
    %2033 = vdwg.mxu0
    %v2034 = vadd.f32 %v1939, %v1983
    %v2035 = vadd.f32 %v1940, %v1985
    %v2036 = vadd.f32 %v1941, %v2026
    %v2037 = vadd.f32 %v1942, %v2028
    %v2038 = vadd.f32 %v1943, %v1987
    %v2039 = vadd.f32 %v1944, %v1989
    %v2040 = vadd.f32 %v1945, %v2030
    %v2041 = vadd.f32 %v1946, %v2032
    %v2042 = vxor.u32 %v2034, 2147483648
    %v2043 = vxor.u32 %v2038, 2147483648
    %v2044 = vmul.f32 %v2042, 1.442695
    %v2045 = vpow.pop %v2044
    %v2046 = vmul.f32 %v2043, 1.442695
    %v2047 = vpow.pop %v2046
    %v2048 = vadd.f32 %v2045, 1.0
    %v2049 = vadd.f32 %v2047, 1.0
    %v2050 = vrcp.pop %v2048
    %v2051 = vmul.f32 1.0, %v2050
    %v2052 = vrcp.pop %v2049
    %v2053 = vmul.f32 1.0, %v2052
    %v2054 = vxor.u32 %v2035, 2147483648
    %v2055 = vxor.u32 %v2039, 2147483648
    %v2056 = vmul.f32 %v2054, 1.442695
    %v2057 = vpow.pop %v2056
    %v2058 = vmul.f32 %v2055, 1.442695
    %v2059 = vpow.pop %v2058
    %v2060 = vadd.f32 %v2057, 1.0
    %v2061 = vadd.f32 %v2059, 1.0
    %v2062 = vrcp.pop %v2060
    %v2063 = vmul.f32 1.0, %v2062
    %v2064 = vrcp.pop %v2061
    %v2065 = vmul.f32 1.0, %v2064
    %v2066 = vtanh.pop %v2036
    %v2067 = vtanh.pop %v2040
    %v2068 = vxor.u32 %v2037, 2147483648
    %v2069 = vxor.u32 %v2041, 2147483648
    %v2070 = vmul.f32 %v2068, 1.442695
    %v2071 = vpow.pop %v2070
    %v2072 = vmul.f32 %v2069, 1.442695
    %v2073 = vpow.pop %v2072
    %v2074 = vadd.f32 %v2071, 1.0
    %v2075 = vadd.f32 %v2073, 1.0
    %v2076 = vrcp.pop %v2074
    %v2077 = vmul.f32 1.0, %v2076
    %v2078 = vrcp.pop %v2075
    %v2079 = vmul.f32 1.0, %v2078
    %v2080 = vmul.f32 %v2063, %v1929
    %v2081 = vmul.f32 %v2065, %v1930
    %v2082 = vmul.f32 %v2051, %v2066
    %v2083 = vmul.f32 %v2053, %v2067
    %v2084 = vadd.f32 %v2080, %v2082
    %v2085 = vadd.f32 %v2081, %v2083
    %v2086 = vtanh.pop %v2084
    %v2087 = vtanh.pop %v2085
    %v2088 = vmul.f32 %v2077, %v2086
    %v2089 = vmul.f32 %v2079, %v2087
    %v2090 = vpack.c.bf16 %v2089, %v2088
    %v2091 = vld [vmem:[#allocation9] sm:$0xf]
    %v2092 = vld [vmem:[#allocation9 + $0x4] sm:$0xf]
    %v2093 = vld [vmem:[#allocation9 + $0x8] sm:$0xf]
    %v2094 = vld [vmem:[#allocation9 + $0xc] sm:$0xf]
    %v2095 = vld [vmem:[#allocation9 + $0x10] sm:$0xf]
    %v2096 = vld [vmem:[#allocation9 + $0x14] sm:$0xf]
    %v2097 = vld [vmem:[#allocation9 + $0x18] sm:$0xf]
    %v2098 = vld [vmem:[#allocation9 + $0x1c] sm:$0xf]
    %v2099 = vld [vmem:[#allocation9 + $0x20] sm:$0xf]
    %v2100 = vld [vmem:[#allocation9 + $0x24] sm:$0xf]
    %v2101 = vld [vmem:[#allocation9 + $0x28] sm:$0xf]
    %v2102 = vld [vmem:[#allocation9 + $0x2c] sm:$0xf]
    %v2103 = vld [vmem:[#allocation9 + $0x30] sm:$0xf]
    %v2104 = vld [vmem:[#allocation9 + $0x34] sm:$0xf]
    %v2105 = vld [vmem:[#allocation9 + $0x38] sm:$0xf]
    %v2106 = vld [vmem:[#allocation9 + $0x3c] sm:$0xf]
    %v2107 = vld [vmem:[%s5] sm:$0x1]
    %v2109 = vlaneseq
    %v2110 = vshrl.u32 %v2109, 7
    %v2111 = vsub.s32 0, %v2110
    %v2112 = vrot.slane %v2107, %v2111
    %v2130 = vunpack.c.l.b16 %v2091
    %v2131 = vunpack.c.l.b16 %v2092
    %v2132 = vunpack.c.l.b16 %v2093
    %v2133 = vunpack.c.l.b16 %v2094
    %v2134 = vunpack.c.l.b16 %v2095
    %v2135 = vunpack.c.l.b16 %v2096
    %v2136 = vunpack.c.l.b16 %v2097
    %v2137 = vunpack.c.l.b16 %v2098
    %v2138 = vunpack.c.l.b16 %v2099
    %v2139 = vunpack.c.l.b16 %v2100
    %v2140 = vunpack.c.l.b16 %v2101
    %v2141 = vunpack.c.l.b16 %v2102
    %v2142 = vunpack.c.l.b16 %v2103
    %v2143 = vunpack.c.l.b16 %v2104
    %v2144 = vunpack.c.l.b16 %v2105
    %v2145 = vunpack.c.l.b16 %v2106
    %v2146 = vpack.c.b16 %v2131, %v2130
    %v2147 = vpack.c.b16 %v2133, %v2132
    %v2148 = vpack.c.b16 %v2135, %v2134
    %v2149 = vpack.c.b16 %v2137, %v2136
    %v2150 = vpack.c.b16 %v2139, %v2138
    %v2151 = vpack.c.b16 %v2141, %v2140
    %v2152 = vpack.c.b16 %v2143, %v2142
    %v2153 = vpack.c.b16 %v2145, %v2144
    %2162 = vmatprep.subr.bf16.mxu0 0
    %2163 = vmatpush1.bf16.msra.mxu0 %v2146
    %2164 = vmatprep.subr.bf16.mxu0 0
    %2165 = vmatpush1.bf16.msra.mxu0 %v2147
    %2166 = vmatprep.subr.bf16.mxu0 0
    %2167 = vmatpush1.bf16.msra.mxu0 %v2148
    %2168 = vmatprep.subr.bf16.mxu0 0
    %2169 = vmatpush1.bf16.msra.mxu0 %v2149
    %2170 = vmatprep.subr.bf16.mxu0 0
    %2171 = vmatpush1.bf16.msra.mxu0 %v2150
    %2172 = vmatprep.subr.bf16.mxu0 0
    %2173 = vmatpush1.bf16.msra.mxu0 %v2151
    %2174 = vmatprep.subr.bf16.mxu0 0
    %2175 = vmatpush1.bf16.msra.mxu0 %v2152
    %2176 = vmatprep.subr.bf16.mxu0 0
    %2177 = vmatpush1.bf16.msra.mxu0 %v2153
    %2178 = vmatprep.subr.bf16.mxu0 0
    %2179 = vmatpush1.bf16.msra.mxu0 0
    %2180 = vmatprep.subr.bf16.mxu0 0
    %2181 = vmatpush1.bf16.msra.mxu0 0
    %2182 = vmatprep.subr.bf16.mxu0 0
    %2183 = vmatpush1.bf16.msra.mxu0 0
    %2184 = vmatprep.subr.bf16.mxu0 0
    %2185 = vmatpush1.bf16.msra.mxu0 0
    %2186 = vmatprep.subr.bf16.mxu0 0
    %2187 = vmatpush1.bf16.msra.mxu0 0
    %2188 = vmatprep.subr.bf16.mxu0 0
    %2189 = vmatpush1.bf16.msra.mxu0 0
    %2190 = vmatprep.subr.bf16.mxu0 0
    %2191 = vmatpush1.bf16.msra.mxu0 0
    %2192 = vmatprep.subr.bf16.mxu0 0
    %2193 = vmatpush1.bf16.msra.mxu0 0
    %2194 = vmatprep.mubr.bf16.mxu0 0
    %2195 = vmatmul.mubr.bf16.gmra.mrb[0].mxu0 %v2090
    %v2196 = vpop.f32.mrb[0].mxu0
    %v2197 = vadd.f32 %v2112, %v2196
    %v2198 = vpop.f32.mrb[0].mxu0
    %v2199 = vpop.f32.mrb[0].mxu0
    %v2200 = vadd.f32 %v2112, %v2199
    %v2201 = vpop.f32.mrb[0].mxu0
    %2202 = vdwg.mxu0
    %v2203 = vxor.u32 %v2197, 2147483648
    %v2204 = vxor.u32 %v2200, 2147483648
    %v2205 = vmul.f32 %v2203, 1.442695
    %v2206 = vpow.pop %v2205
    %v2207 = vmul.f32 %v2204, 1.442695
    %v2208 = vpow.pop %v2207
    %v2209 = vadd.f32 %v2206, 1.0
    %v2210 = vadd.f32 %v2208, 1.0
    %v2211 = vrcp.pop %v2209
    %v2212 = vmul.f32 1.0, %v2211
    %v2213 = vrcp.pop %v2210
    %v2214 = vmul.f32 1.0, %v2213
    %2215 = vst [vmem:[#allocation11] sm:$0xff] %v2212
    %2216 = vst [vmem:[#allocation11 + $0x8] sm:$0xff] %v2214
    %2217 = vst [vmem:[#allocation12] sm:$0xff] %v2088
    %2218 = vst [vmem:[#allocation12 + $0x8] sm:$0xff] %v2089
    %2219 = vst [vmem:[#allocation14] sm:$0xff] %v2084
    %2220 = vst [vmem:[#allocation14 + $0x8] sm:$0xff] %v2085
    // Predicated region
    $region42: #{tpu_custom_call.1} parent=1 // pred_check
      _
    $region43: #{tpu_custom_call.1} parent=1 // pred_check_branch
      %2222 = sbr.rel (0) target = $region45
    $region44: #{tpu_custom_call.1} parent=1 // pred_region
      %s2224 = ssub.s32 256, 256
      %2225 = vsyncadd [#allocation5], %s2224
      %s2226 = sshll.u32 [#allocation11], 4
      %s2227 = int_to_ptr.vmem [resolvable:$true] %s2226
      %2232 = dma.vmem_to_hbm [thread:$0]  %s2227, 256, %s6, [#allocation5], 128, 128, 8
    $region45: #{tpu_custom_call.1} parent=1 // pred_fallthru
      _
    // Predicated region
    $region46: #{tpu_custom_call.1} parent=1 // pred_check
      _
    $region47: #{tpu_custom_call.1} parent=1 // pred_check_branch
      %2234 = sbr.rel (0) target = $region49
    $region48: #{tpu_custom_call.1} parent=1 // pred_region
      %s2236 = ssub.s32 256, 256
      %2237 = vsyncadd [#allocation13], %s2236
      %s2238 = sshll.u32 [#allocation12], 4
      %s2239 = int_to_ptr.vmem [resolvable:$true] %s2238
      %2244 = dma.vmem_to_hbm [thread:$0]  %s2239, 256, %s7, [#allocation13], 128, 128, 8
    $region49: #{tpu_custom_call.1} parent=1 // pred_fallthru
      _
    // Predicated region
    $region50: #{tpu_custom_call.1} parent=1 // pred_check
      _
    $region51: #{tpu_custom_call.1} parent=1 // pred_check_branch
      %2246 = sbr.rel (0) target = $region53
    $region52: #{tpu_custom_call.1} parent=1 // pred_region
      %s2248 = ssub.s32 256, 256
      %2249 = vsyncadd [#allocation13], %s2248
      %s2250 = sshll.u32 [#allocation14], 4
      %s2251 = int_to_ptr.vmem [resolvable:$true] %s2250
      %2256 = dma.vmem_to_hbm [thread:$0]  %s2251, 256, %s8, [#allocation13], 128, 128, 8
    $region53: #{tpu_custom_call.1} parent=1 // pred_fallthru
      _
    // Predicated region
    $region54: #{tpu_custom_call.1} parent=1 // pred_check
      _
    $region55: #{tpu_custom_call.1} parent=1 // pred_check_branch
      %2258 = sbr.rel (0) target = $region57
    $region56: #{tpu_custom_call.1} parent=1 // pred_region
      %2259 = dma.done [#allocation5], 256
    $region57: #{tpu_custom_call.1} parent=1 // pred_fallthru
      _
    // Predicated region
    $region58: #{tpu_custom_call.1} parent=1 // pred_check
      _
    $region59: #{tpu_custom_call.1} parent=1 // pred_check_branch
      %2261 = sbr.rel (0) target = $region61
    $region60: #{tpu_custom_call.1} parent=1 // pred_region
      %2262 = dma.done [#allocation13], 256
    $region61: #{tpu_custom_call.1} parent=1 // pred_fallthru
      _
    // Predicated region
    $region62: #{tpu_custom_call.1} parent=1 // pred_check
      _
    $region63: #{tpu_custom_call.1} parent=1 // pred_check_branch
      %2264 = sbr.rel (0) target = $region65
    $region64: #{tpu_custom_call.1} parent=1 // pred_region
      %2265 = dma.done [#allocation13], 256
    $region65: #{tpu_custom_call.1} parent=1 // pred_fallthru
      _
    %2266 = vsyncpa [#allocation4], 1
    %2267 = vsyncpa [#allocation7], 1
    %2268 = vsyncpa [#allocation10], 1
    %2269 = vsyncpa [#allocation5], 1
    %2270 = vsyncpa [#allocation13], 1

</llo_original>
